<compile_context>
chip_gen: v7x
topology: tpu7x:2x2x1
jax: 0.10.0
libtpu: 0.0.40
codegen_flags: <defaults>
</compile_context>

<pallas_src>
import numpy as np
import jax
import jax.numpy as jnp
from jax.experimental import pallas as pl
from jax.experimental.pallas import tpu as pltpu


CPAD = 8                    # conv input channels padded to 8 (8-sublane-aligned blocks)
KTAPS = 9                   # 3x3 taps
KCOLS = KTAPS * CPAD        # 72 im2col rows
KEXT = KCOLS + CPAD         # 80: + 8 "ones" rows carrying the folded BN biases


# ----------------------------------------------------------------------------
# Batch-packing choice
# ----------------------------------------------------------------------------
def _pick_batch_tile(N, HW, patch_budget_bytes=4 << 20):
    """Images packed per grid step.  Keep >= 2 grid steps (so the 'parallel'
    grid axis can feed both v7x TensorCores) and cap the im2col scratch size."""
    max_bt = max(1, patch_budget_bytes // (KEXT * 4 * HW))
    best = 1
    for bt in range(1, N + 1):
        if N % bt == 0 and bt <= max_bt and (N // bt >= 2 or N == 1):
            best = bt
    return best


# ----------------------------------------------------------------------------
# Fused forward kernel (one grid step == B_TILE images)
# ----------------------------------------------------------------------------
def _make_fused_kernel(B_TILE, H, W):
    HW = H * W
    BHW = B_TILE * HW
    # tap t = kh*3 + kw; lane offset d = (kh-1)*W + (kw-1); t == 4 is the centre
    taps = [(kh - 1) * W + (kw - 1) for kh in range(3) for kw in range(3)]

    def kernel(x_ref, m_ref, w_ref, o_ref, patch_ref):
        masks = m_ref[...]                                    # (8, BHW) boundary masks
        w = w_ref[...]                                        # (40, 80) weight slab
        w0, w1, w2, we = w[0:8], w[8:16], w[16:24], w[24:36]

        # "ones" rows feeding the folded bias columns (72..79) of the slab.
        patch_ref[KCOLS:KEXT, :] = jnp.ones((CPAD, BHW), jnp.float32)

        def fill_patch(x):                                    # x: (8, BHW) f32
            for t, d in enumerate(taps):
                v = x if d == 0 else pltpu.roll(x, (-d) % BHW, axis=1)
                if t != 4:                                    # centre tap: mask is all-ones
                    mi = t if t < 4 else t - 1
                    v = v * masks[mi:mi + 1, :]               # SAME zero-pad (per image)
                patch_ref[8 * t:8 * (t + 1), :] = v

        def conv(x, wmat):                                    # one MXU matmul, K = 80
            fill_patch(x)
            return jnp.dot(wmat, patch_ref[...],
                           preferred_element_type=jnp.float32)

        x0 = x_ref[...].astype(jnp.float32)                   # (8, BHW), rows 3..7 zero
        a0 = conv(x0, w0)                                     # CNN0
        z1 = conv(a0, w1)                                     # Block1.conv1 (*BN1 s, +b1)
        z1 = jnp.where(z1 >= 0.0, z1, 0.01 * z1)              # LeakyReLU(0.01)
        z2 = conv(z1, w2)                                     # Block1.conv2 (*BN2 s, +b2)
        r = jnp.maximum(a0 + z2, 0.0)                         # residual + ReLU (commutes
                                                              # with PixelShuffle)
        # PixelShuffle(2) + end conv folded into one sub-pixel matmul; rows of
        # the (12, BHW) result are (out_ch, row_parity, col_parity) sub-lattices.
        o_ref[...] = jnp.tanh(conv(r, we)).astype(o_ref.dtype)

    return kernel


# ----------------------------------------------------------------------------
# Weight / mask preparation (tiny, pure JAX/numpy, done once per call)
# ----------------------------------------------------------------------------
def _fold_bn(gamma, beta, mean, var, eps=1e-5):
    s = gamma / jnp.sqrt(var + eps)
    return s, beta - mean * s


def _conv_w_to_mat(w_hwio):
    """(KH,KW,Cin,Cout) HWIO -> (Cout, 72), columns = (kh, kw, cin padded to 8)."""
    KH, KW, Ci, Co = w_hwio.shape
    assert KH == 3 and KW == 3, "only 3x3 stride-1 convs supported"
    wp = jnp.pad(w_hwio.astype(jnp.float32),
                 ((0, 0), (0, 0), (0, CPAD - Ci), (0, 0)))
    return jnp.transpose(wp, (3, 0, 1, 2)).reshape(Co, KCOLS)


def _subpixel_end_weights(w_end):
    """Fold PixelShuffle(2) + 3x3 end conv into a (12, 72) matrix acting on the
    pre-shuffle (8ch, HxW) feature map.  Row = c*4 + a*2 + b (output channel c,
    output-pixel parity (a,b)); column = (shift_h*3 + shift_w)*8 + pre_channel,
    with pre_channel = ci*4 + row_parity*2 + col_parity (PyTorch PixelShuffle)."""
    E = np.zeros((2, 3, 3, 2), np.float32)   # [out parity, tap, shift idx, sub parity]
    for a in range(2):
        for k in range(3):
            d = a + k - 1
            E[a, k, d // 2 + 1, d % 2] = 1.0
    E = jnp.asarray(E)
    w6 = jnp.einsum("amip,bnjq,mneo->aboijepq", E, E, w_end.astype(jnp.float32))
    w6 = w6.reshape(2, 2, 3, 3, 3, CPAD)               # (a, b, c, i, j, pre)
    w6 = jnp.transpose(w6, (2, 0, 1, 3, 4, 5))         # (c, a, b, i, j, pre)
    return w6.reshape(12, KCOLS)


def _build_weight_slab(p):
    """All conv weights (+ folded BN scale/bias) in one (40, 80) slab.
    Columns 0..71: im2col taps; column 72: bias (multiplies the ones-rows)."""
    w0m = _conv_w_to_mat(p["w_cnn0"])                      # (8, 72)
    s1, b1 = _fold_bn(**p["bn1"])
    w1m = _conv_w_to_mat(p["w_b1a"]) * s1[:, None]         # BN1 scale folded
    s2, b2 = _fold_bn(**p["bn2"])
    w2m = _conv_w_to_mat(p["w_b1b"]) * s2[:, None]         # BN2 scale folded
    wem = _subpixel_end_weights(p["w_end"])                # (12, 72)

    def with_bias(wm, bias):
        ext = jnp.zeros((wm.shape[0], CPAD), jnp.float32)
        if bias is not None:
            ext = ext.at[:, 0].set(bias.astype(jnp.float32))
        return jnp.concatenate([wm, ext], axis=1)          # (rows, 80)

    slab = jnp.concatenate([with_bias(w0m, None), with_bias(w1m, b1),
                            with_bias(w2m, b2), with_bias(wem, None)], axis=0)
    return jnp.pad(slab, ((0, 40 - slab.shape[0]), (0, 0)))  # (40, 80)


def _tap_masks(H, W, B_TILE):
    """(8, B_TILE*H*W) SAME-padding masks for the 8 non-centre taps, tiled per image."""
    HW = H * W
    hh, ww = np.divmod(np.arange(HW), W)
    rows = []
    for kh in range(3):
        for kw in range(3):
            if kh == 1 and kw == 1:
                continue
            dh, dw = kh - 1, kw - 1
            valid = ((hh + dh >= 0) & (hh + dh < H) &
                     (ww + dw >= 0) & (ww + dw < W)).astype(np.float32)
            rows.append(np.tile(valid, B_TILE))
    return jnp.asarray(np.stack(rows, axis=0))


# ----------------------------------------------------------------------------
# generator forward (Pallas) and a pure-JAX reference for verification
# ----------------------------------------------------------------------------
def generator_forward_pallas(x_nchw, p):
    N, Cin, H, W = x_nchw.shape
    assert Cin == 3 and (H * W) % 128 == 0, "need 3 input channels and H*W % 128 == 0"
    HW = H * W
    B_TILE = _pick_batch_tile(N, HW)
    BHW = B_TILE * HW
    steps = N // B_TILE

    # channels -> sublanes, (image, pixel) -> lanes; the 3->8 channel pad fuses
    # with this (required) transpose into one tiny XLA copy.
    x2 = jnp.transpose(x_nchw.astype(jnp.float32), (1, 0, 2, 3)).reshape(Cin, N * HW)
    x2 = jnp.pad(x2, ((0, CPAD - Cin), (0, 0)))            # (8, N*HW)

    masks = _tap_masks(H, W, B_TILE)                       # (8, BHW), constant per call
    slab = _build_weight_slab(p)                           # (40, 80)

    # VMEM budget: patch scratch + live activations + double-buffered I/O + weights.
    est = 4 * BHW * (KEXT + 12 * 12 + 2 * (CPAD + 8 + 12)) + 4 * 40 * 128 * 2
    vmem_limit = int(min(max(4 * est, 8 << 20), 48 << 20))

    out = pl.pallas_call(
        _make_fused_kernel(B_TILE, H, W),
        out_shape=jax.ShapeDtypeStruct((12, N * HW), jnp.float32),
        grid=(steps,),
        in_specs=[
            pl.BlockSpec((CPAD, BHW), lambda n: (0, n)),   # packed input images
            pl.BlockSpec((8, BHW), lambda n: (0, 0)),      # boundary masks (fetched once)
            pl.BlockSpec((40, 80), lambda n: (0, 0)),      # weight slab (fetched once)
        ],
        out_specs=pl.BlockSpec((12, BHW), lambda n: (0, n)),
        scratch_shapes=[pltpu.VMEM((KEXT, BHW), jnp.float32)],   # reused im2col patch
        compiler_params=pltpu.CompilerParams(
            dimension_semantics=("parallel",),             # >=2 steps -> both v7x TCs
            vmem_limit_bytes=vmem_limit),
    )(x2, masks, slab)

    # Un-interleave the 4 sub-lattices into the 2x-upsampled NCHW image
    # (layout-only op on the tiny final output; noise at these sizes).
    out = out.reshape(3, 2, 2, N, H, W)                    # (c, a, b, n, h, w)
    out = jnp.transpose(out, (3, 0, 4, 1, 5, 2))           # (n, c, h, a, w, b)
    return out.reshape(N, 3, 2 * H, 2 * W)


def _conv_ref(x, w):
    return jax.lax.conv_general_dilated(
        x, w, (1, 1), "SAME", dimension_numbers=("NHWC", "HWIO", "NHWC"))


def _pixel_shuffle_nhwc(x, r):
    N, H, W, C = x.shape
    Co = C // (r * r)
    x = x.reshape(N, H, W, Co, r, r)
    x = jnp.transpose(x, (0, 1, 4, 2, 5, 3))
    return x.reshape(N, H * r, W * r, Co)


def generator_forward_ref(x_nchw, p):
    x = jnp.transpose(x_nchw, (0, 2, 3, 1))
    x = _conv_ref(x, p["w_cnn0"])
    s1, b1 = _fold_bn(**p["bn1"])
    y = _conv_ref(x, p["w_b1a"]) * s1 + b1
    y = jnp.where(y >= 0, y, 0.01 * y)
    s2, b2 = _fold_bn(**p["bn2"])
    y = _conv_ref(y, p["w_b1b"]) * s2 + b2
    x = x + y
    x = _pixel_shuffle_nhwc(x, 2)
    x = jnp.maximum(x, 0.0)
    x = jnp.tanh(_conv_ref(x, p["w_end"]))
    return jnp.transpose(x, (0, 3, 1, 2))


# ----------------------------------------------------------------------------
# Deterministic parameter init (synthetic; shapes follow the module __init__)
# ----------------------------------------------------------------------------
def init_params(key):
    ks = jax.random.split(key, 12)

    def cw(k, kh, kw, cin, cout):
        return 0.1 * jax.random.normal(k, (kh, kw, cin, cout), jnp.float32)

    def bn(k0, k1, k2, k3, c):
        return dict(
            gamma=1.0 + 0.1 * jax.random.normal(k0, (c,), jnp.float32),
            beta=0.1 * jax.random.normal(k1, (c,), jnp.float32),
            mean=0.05 * jax.random.normal(k2, (c,), jnp.float32),
            var=1.0 + 0.1 * jnp.abs(jax.random.normal(k3, (c,), jnp.float32)),
        )

    return {
        "w_cnn0": cw(ks[0], 3, 3, 3, 8),    # CNN0: 3 -> 8
        "w_b1a": cw(ks[1], 3, 3, 8, 8),     # Block1.conv1
        "w_b1b": cw(ks[2], 3, 3, 8, 8),     # Block1.conv2
        "bn1": bn(ks[3], ks[4], ks[5], ks[6], 8),
        "bn2": bn(ks[7], ks[8], ks[9], ks[10], 8),
        "w_end": cw(ks[11], 3, 3, 2, 3),    # end CNN: 2 -> 3 (after PixelShuffle)
    }


if __name__ == "__main__":
    key = jax.random.PRNGKey(0)
    kx, kp, kx2 = jax.random.split(key, 3)
    params = init_params(kp)
    fwd = jax.jit(generator_forward_pallas)

    # Shipped config: N=2 -> B_TILE=1, grid=(2,).
    x = jax.random.normal(kx, (2, 3, 16, 16), jnp.float32)   # NCHW, like PyTorch
    out = jax.block_until_ready(fwd(x, params))
    ref = generator_forward_ref(x, params)
    assert out.shape == (2, 3, 32, 32), out.shape
    err = float(jnp.max(jnp.abs(out - ref)))
    assert bool(jnp.allclose(out, ref, atol=1e-4, rtol=1e-4)), err

    # Batch-packed path: N=4 -> B_TILE=2 images per grid step, grid=(2,).
    x4 = jax.random.normal(kx2, (4, 3, 16, 16), jnp.float32)
    out4 = jax.block_until_ready(fwd(x4, params))
    ref4 = generator_forward_ref(x4, params)
    assert out4.shape == (4, 3, 32, 32), out4.shape
    err4 = float(jnp.max(jnp.abs(out4 - ref4)))
    assert bool(jnp.allclose(out4, ref4, atol=1e-4, rtol=1e-4)), err4

    print("KERNEL_OK")
</pallas_src>

<mosaic_0001>
module attributes {stable_mosaic.version = 11 : i64} {
  func.func @kernel(%arg0: i32, %arg1: memref<8x256xf32, #tpu.memory_space<vmem>>, %arg2: memref<8x256xf32, #tpu.memory_space<vmem>>, %arg3: memref<40x80xf32, #tpu.memory_space<vmem>>, %arg4: memref<12x256xf32, #tpu.memory_space<vmem>>, %arg5: memref<80x256xf32, #tpu.memory_space<vmem>>) attributes {dimension_semantics = [#tpu.dimension_semantics<parallel>], iteration_bounds = array<i64: 2>, scalar_prefetch = 0 : i64, scratch_operands = 1 : i64, tpu.core_type = #tpu.core_type<tc>, window_params = [{transform_indices = @transform_0, window_bounds = array<i64: 8, 256>}, {pipeline_mode = #tpu.pipeline_mode<synchronous>, transform_indices = @transform_1, window_bounds = array<i64: 8, 256>}, {pipeline_mode = #tpu.pipeline_mode<synchronous>, transform_indices = @transform_2, window_bounds = array<i64: 40, 80>}, {transform_indices = @transform_3, window_bounds = array<i64: 12, 256>}]} {
    %c0 = arith.constant 0 : index
    %c0_0 = arith.constant 0 : index
    %0 = vector.load %arg2[%c0, %c0_0] : memref<8x256xf32, #tpu.memory_space<vmem>>, vector<8x256xf32>
    %c0_1 = arith.constant 0 : index
    %c0_2 = arith.constant 0 : index
    %1 = vector.load %arg3[%c0_1, %c0_2] : memref<40x80xf32, #tpu.memory_space<vmem>>, vector<40x80xf32>
    %2 = vector.extract_strided_slice %1 {offsets = [0, 0], sizes = [8, 80], strides = [1, 1]} : vector<40x80xf32> to vector<8x80xf32>
    %3 = vector.extract_strided_slice %1 {offsets = [8, 0], sizes = [8, 80], strides = [1, 1]} : vector<40x80xf32> to vector<8x80xf32>
    %4 = vector.extract_strided_slice %1 {offsets = [16, 0], sizes = [8, 80], strides = [1, 1]} : vector<40x80xf32> to vector<8x80xf32>
    %5 = vector.extract_strided_slice %1 {offsets = [24, 0], sizes = [12, 80], strides = [1, 1]} : vector<40x80xf32> to vector<12x80xf32>
    %cst = arith.constant 1.000000e+00 : f32
    %6 = vector.broadcast %cst : f32 to vector<8x256xf32>
    %c72 = arith.constant 72 : index
    %c0_3 = arith.constant 0 : index
    %7 = vector.load %arg5[%c72, %c0_3] : memref<80x256xf32, #tpu.memory_space<vmem>>, vector<8x256xf32>
    tpu.vector_store %arg5[%c72, %c0_3], %6 {strides = array<i32>} : memref<80x256xf32, #tpu.memory_space<vmem>>, vector<8x256xf32>,
    %c0_4 = arith.constant 0 : index
    %c0_5 = arith.constant 0 : index
    %8 = vector.load %arg1[%c0_4, %c0_5] : memref<8x256xf32, #tpu.memory_space<vmem>>, vector<8x256xf32>
    %c17_i32 = arith.constant 17 : i32
    %9 = tpu.dynamic_rotate %8 by %c17_i32 dim 1 : vector<8x256xf32>, i32 -> vector<8x256xf32>
    %10 = vector.extract_strided_slice %0 {offsets = [0, 0], sizes = [1, 256], strides = [1, 1]} : vector<8x256xf32> to vector<1x256xf32>
    %11 = vector.broadcast %10 : vector<1x256xf32> to vector<8x256xf32>
    %12 = arith.mulf %9, %11 : vector<8x256xf32>
    %c0_6 = arith.constant 0 : index
    %c0_7 = arith.constant 0 : index
    %13 = vector.load %arg5[%c0_6, %c0_7] : memref<80x256xf32, #tpu.memory_space<vmem>>, vector<8x256xf32>
    tpu.vector_store %arg5[%c0_6, %c0_7], %12 {strides = array<i32>} : memref<80x256xf32, #tpu.memory_space<vmem>>, vector<8x256xf32>,
    %c16_i32 = arith.constant 16 : i32
    %14 = tpu.dynamic_rotate %8 by %c16_i32 dim 1 : vector<8x256xf32>, i32 -> vector<8x256xf32>
    %15 = vector.extract_strided_slice %0 {offsets = [1, 0], sizes = [1, 256], strides = [1, 1]} : vector<8x256xf32> to vector<1x256xf32>
    %16 = vector.broadcast %15 : vector<1x256xf32> to vector<8x256xf32>
    %17 = arith.mulf %14, %16 : vector<8x256xf32>
    %c8 = arith.constant 8 : index
    %c0_8 = arith.constant 0 : index
    %18 = vector.load %arg5[%c8, %c0_8] : memref<80x256xf32, #tpu.memory_space<vmem>>, vector<8x256xf32>
    tpu.vector_store %arg5[%c8, %c0_8], %17 {strides = array<i32>} : memref<80x256xf32, #tpu.memory_space<vmem>>, vector<8x256xf32>,
    %c15_i32 = arith.constant 15 : i32
    %19 = tpu.dynamic_rotate %8 by %c15_i32 dim 1 : vector<8x256xf32>, i32 -> vector<8x256xf32>
    %20 = vector.extract_strided_slice %0 {offsets = [2, 0], sizes = [1, 256], strides = [1, 1]} : vector<8x256xf32> to vector<1x256xf32>
    %21 = vector.broadcast %20 : vector<1x256xf32> to vector<8x256xf32>
    %22 = arith.mulf %19, %21 : vector<8x256xf32>
    %c16 = arith.constant 16 : index
    %c0_9 = arith.constant 0 : index
    %23 = vector.load %arg5[%c16, %c0_9] : memref<80x256xf32, #tpu.memory_space<vmem>>, vector<8x256xf32>
    tpu.vector_store %arg5[%c16, %c0_9], %22 {strides = array<i32>} : memref<80x256xf32, #tpu.memory_space<vmem>>, vector<8x256xf32>,
    %c1_i32 = arith.constant 1 : i32
    %24 = tpu.dynamic_rotate %8 by %c1_i32 dim 1 : vector<8x256xf32>, i32 -> vector<8x256xf32>
    %25 = vector.extract_strided_slice %0 {offsets = [3, 0], sizes = [1, 256], strides = [1, 1]} : vector<8x256xf32> to vector<1x256xf32>
    %26 = vector.broadcast %25 : vector<1x256xf32> to vector<8x256xf32>
    %27 = arith.mulf %24, %26 : vector<8x256xf32>
    %c24 = arith.constant 24 : index
    %c0_10 = arith.constant 0 : index
    %28 = vector.load %arg5[%c24, %c0_10] : memref<80x256xf32, #tpu.memory_space<vmem>>, vector<8x256xf32>
    tpu.vector_store %arg5[%c24, %c0_10], %27 {strides = array<i32>} : memref<80x256xf32, #tpu.memory_space<vmem>>, vector<8x256xf32>,
    %c32 = arith.constant 32 : index
    %c0_11 = arith.constant 0 : index
    %29 = vector.load %arg5[%c32, %c0_11] : memref<80x256xf32, #tpu.memory_space<vmem>>, vector<8x256xf32>
    tpu.vector_store %arg5[%c32, %c0_11], %8 {strides = array<i32>} : memref<80x256xf32, #tpu.memory_space<vmem>>, vector<8x256xf32>,
    %c255_i32 = arith.constant 255 : i32
    %30 = tpu.dynamic_rotate %8 by %c255_i32 dim 1 : vector<8x256xf32>, i32 -> vector<8x256xf32>
    %31 = vector.extract_strided_slice %0 {offsets = [4, 0], sizes = [1, 256], strides = [1, 1]} : vector<8x256xf32> to vector<1x256xf32>
    %32 = vector.broadcast %31 : vector<1x256xf32> to vector<8x256xf32>
    %33 = arith.mulf %30, %32 : vector<8x256xf32>
    %c40 = arith.constant 40 : index
    %c0_12 = arith.constant 0 : index
    %34 = vector.load %arg5[%c40, %c0_12] : memref<80x256xf32, #tpu.memory_space<vmem>>, vector<8x256xf32>
    tpu.vector_store %arg5[%c40, %c0_12], %33 {strides = array<i32>} : memref<80x256xf32, #tpu.memory_space<vmem>>, vector<8x256xf32>,
    %c241_i32 = arith.constant 241 : i32
    %35 = tpu.dynamic_rotate %8 by %c241_i32 dim 1 : vector<8x256xf32>, i32 -> vector<8x256xf32>
    %36 = vector.extract_strided_slice %0 {offsets = [5, 0], sizes = [1, 256], strides = [1, 1]} : vector<8x256xf32> to vector<1x256xf32>
    %37 = vector.broadcast %36 : vector<1x256xf32> to vector<8x256xf32>
    %38 = arith.mulf %35, %37 : vector<8x256xf32>
    %c48 = arith.constant 48 : index
    %c0_13 = arith.constant 0 : index
    %39 = vector.load %arg5[%c48, %c0_13] : memref<80x256xf32, #tpu.memory_space<vmem>>, vector<8x256xf32>
    tpu.vector_store %arg5[%c48, %c0_13], %38 {strides = array<i32>} : memref<80x256xf32, #tpu.memory_space<vmem>>, vector<8x256xf32>,
    %c240_i32 = arith.constant 240 : i32
    %40 = tpu.dynamic_rotate %8 by %c240_i32 dim 1 : vector<8x256xf32>, i32 -> vector<8x256xf32>
    %41 = vector.extract_strided_slice %0 {offsets = [6, 0], sizes = [1, 256], strides = [1, 1]} : vector<8x256xf32> to vector<1x256xf32>
    %42 = vector.broadcast %41 : vector<1x256xf32> to vector<8x256xf32>
    %43 = arith.mulf %40, %42 : vector<8x256xf32>
    %c56 = arith.constant 56 : index
    %c0_14 = arith.constant 0 : index
    %44 = vector.load %arg5[%c56, %c0_14] : memref<80x256xf32, #tpu.memory_space<vmem>>, vector<8x256xf32>
    tpu.vector_store %arg5[%c56, %c0_14], %43 {strides = array<i32>} : memref<80x256xf32, #tpu.memory_space<vmem>>, vector<8x256xf32>,
    %c239_i32 = arith.constant 239 : i32
    %45 = tpu.dynamic_rotate %8 by %c239_i32 dim 1 : vector<8x256xf32>, i32 -> vector<8x256xf32>
    %46 = vector.extract_strided_slice %0 {offsets = [7, 0], sizes = [1, 256], strides = [1, 1]} : vector<8x256xf32> to vector<1x256xf32>
    %47 = vector.broadcast %46 : vector<1x256xf32> to vector<8x256xf32>
    %48 = arith.mulf %45, %47 : vector<8x256xf32>
    %c64 = arith.constant 64 : index
    %c0_15 = arith.constant 0 : index
    %49 = vector.load %arg5[%c64, %c0_15] : memref<80x256xf32, #tpu.memory_space<vmem>>, vector<8x256xf32>
    tpu.vector_store %arg5[%c64, %c0_15], %48 {strides = array<i32>} : memref<80x256xf32, #tpu.memory_space<vmem>>, vector<8x256xf32>,
    %c0_16 = arith.constant 0 : index
    %c0_17 = arith.constant 0 : index
    %50 = vector.load %arg5[%c0_16, %c0_17] : memref<80x256xf32, #tpu.memory_space<vmem>>, vector<80x256xf32>
    %cst_18 = arith.constant dense<0.000000e+00> : vector<8x256xf32>
    %51 = tpu.matmul %2, %50, %cst_18 {dimension_numbers = #tpu.dot_dimension_numbers<[1], [0], [0], [1], [0, 0, 1, 1], [], []>} : vector<8x80xf32>, vector<80x256xf32>, vector<8x256xf32> -> vector<8x256xf32>
    %c17_i32_19 = arith.constant 17 : i32
    %52 = tpu.dynamic_rotate %51 by %c17_i32_19 dim 1 : vector<8x256xf32>, i32 -> vector<8x256xf32>
    %53 = vector.extract_strided_slice %0 {offsets = [0, 0], sizes = [1, 256], strides = [1, 1]} : vector<8x256xf32> to vector<1x256xf32>
    %54 = vector.broadcast %53 : vector<1x256xf32> to vector<8x256xf32>
    %55 = arith.mulf %52, %54 : vector<8x256xf32>
    %c0_20 = arith.constant 0 : index
    %c0_21 = arith.constant 0 : index
    %56 = vector.load %arg5[%c0_20, %c0_21] : memref<80x256xf32, #tpu.memory_space<vmem>>, vector<8x256xf32>
    tpu.vector_store %arg5[%c0_20, %c0_21], %55 {strides = array<i32>} : memref<80x256xf32, #tpu.memory_space<vmem>>, vector<8x256xf32>,
    %c16_i32_22 = arith.constant 16 : i32
    %57 = tpu.dynamic_rotate %51 by %c16_i32_22 dim 1 : vector<8x256xf32>, i32 -> vector<8x256xf32>
    %58 = vector.extract_strided_slice %0 {offsets = [1, 0], sizes = [1, 256], strides = [1, 1]} : vector<8x256xf32> to vector<1x256xf32>
    %59 = vector.broadcast %58 : vector<1x256xf32> to vector<8x256xf32>
    %60 = arith.mulf %57, %59 : vector<8x256xf32>
    %c8_23 = arith.constant 8 : index
    %c0_24 = arith.constant 0 : index
    %61 = vector.load %arg5[%c8_23, %c0_24] : memref<80x256xf32, #tpu.memory_space<vmem>>, vector<8x256xf32>
    tpu.vector_store %arg5[%c8_23, %c0_24], %60 {strides = array<i32>} : memref<80x256xf32, #tpu.memory_space<vmem>>, vector<8x256xf32>,
    %c15_i32_25 = arith.constant 15 : i32
    %62 = tpu.dynamic_rotate %51 by %c15_i32_25 dim 1 : vector<8x256xf32>, i32 -> vector<8x256xf32>
    %63 = vector.extract_strided_slice %0 {offsets = [2, 0], sizes = [1, 256], strides = [1, 1]} : vector<8x256xf32> to vector<1x256xf32>
    %64 = vector.broadcast %63 : vector<1x256xf32> to vector<8x256xf32>
    %65 = arith.mulf %62, %64 : vector<8x256xf32>
    %c16_26 = arith.constant 16 : index
    %c0_27 = arith.constant 0 : index
    %66 = vector.load %arg5[%c16_26, %c0_27] : memref<80x256xf32, #tpu.memory_space<vmem>>, vector<8x256xf32>
    tpu.vector_store %arg5[%c16_26, %c0_27], %65 {strides = array<i32>} : memref<80x256xf32, #tpu.memory_space<vmem>>, vector<8x256xf32>,
    %c1_i32_28 = arith.constant 1 : i32
    %67 = tpu.dynamic_rotate %51 by %c1_i32_28 dim 1 : vector<8x256xf32>, i32 -> vector<8x256xf32>
    %68 = vector.extract_strided_slice %0 {offsets = [3, 0], sizes = [1, 256], strides = [1, 1]} : vector<8x256xf32> to vector<1x256xf32>
    %69 = vector.broadcast %68 : vector<1x256xf32> to vector<8x256xf32>
    %70 = arith.mulf %67, %69 : vector<8x256xf32>
    %c24_29 = arith.constant 24 : index
    %c0_30 = arith.constant 0 : index
    %71 = vector.load %arg5[%c24_29, %c0_30] : memref<80x256xf32, #tpu.memory_space<vmem>>, vector<8x256xf32>
    tpu.vector_store %arg5[%c24_29, %c0_30], %70 {strides = array<i32>} : memref<80x256xf32, #tpu.memory_space<vmem>>, vector<8x256xf32>,
    %c32_31 = arith.constant 32 : index
    %c0_32 = arith.constant 0 : index
    %72 = vector.load %arg5[%c32_31, %c0_32] : memref<80x256xf32, #tpu.memory_space<vmem>>, vector<8x256xf32>
    tpu.vector_store %arg5[%c32_31, %c0_32], %51 {strides = array<i32>} : memref<80x256xf32, #tpu.memory_space<vmem>>, vector<8x256xf32>,
    %c255_i32_33 = arith.constant 255 : i32
    %73 = tpu.dynamic_rotate %51 by %c255_i32_33 dim 1 : vector<8x256xf32>, i32 -> vector<8x256xf32>
    %74 = vector.extract_strided_slice %0 {offsets = [4, 0], sizes = [1, 256], strides = [1, 1]} : vector<8x256xf32> to vector<1x256xf32>
    %75 = vector.broadcast %74 : vector<1x256xf32> to vector<8x256xf32>
    %76 = arith.mulf %73, %75 : vector<8x256xf32>
    %c40_34 = arith.constant 40 : index
    %c0_35 = arith.constant 0 : index
    %77 = vector.load %arg5[%c40_34, %c0_35] : memref<80x256xf32, #tpu.memory_space<vmem>>, vector<8x256xf32>
    tpu.vector_store %arg5[%c40_34, %c0_35], %76 {strides = array<i32>} : memref<80x256xf32, #tpu.memory_space<vmem>>, vector<8x256xf32>,
    %c241_i32_36 = arith.constant 241 : i32
    %78 = tpu.dynamic_rotate %51 by %c241_i32_36 dim 1 : vector<8x256xf32>, i32 -> vector<8x256xf32>
    %79 = vector.extract_strided_slice %0 {offsets = [5, 0], sizes = [1, 256], strides = [1, 1]} : vector<8x256xf32> to vector<1x256xf32>
    %80 = vector.broadcast %79 : vector<1x256xf32> to vector<8x256xf32>
    %81 = arith.mulf %78, %80 : vector<8x256xf32>
    %c48_37 = arith.constant 48 : index
    %c0_38 = arith.constant 0 : index
    %82 = vector.load %arg5[%c48_37, %c0_38] : memref<80x256xf32, #tpu.memory_space<vmem>>, vector<8x256xf32>
    tpu.vector_store %arg5[%c48_37, %c0_38], %81 {strides = array<i32>} : memref<80x256xf32, #tpu.memory_space<vmem>>, vector<8x256xf32>,
    %c240_i32_39 = arith.constant 240 : i32
    %83 = tpu.dynamic_rotate %51 by %c240_i32_39 dim 1 : vector<8x256xf32>, i32 -> vector<8x256xf32>
    %84 = vector.extract_strided_slice %0 {offsets = [6, 0], sizes = [1, 256], strides = [1, 1]} : vector<8x256xf32> to vector<1x256xf32>
    %85 = vector.broadcast %84 : vector<1x256xf32> to vector<8x256xf32>
    %86 = arith.mulf %83, %85 : vector<8x256xf32>
    %c56_40 = arith.constant 56 : index
    %c0_41 = arith.constant 0 : index
    %87 = vector.load %arg5[%c56_40, %c0_41] : memref<80x256xf32, #tpu.memory_space<vmem>>, vector<8x256xf32>
    tpu.vector_store %arg5[%c56_40, %c0_41], %86 {strides = array<i32>} : memref<80x256xf32, #tpu.memory_space<vmem>>, vector<8x256xf32>,
    %c239_i32_42 = arith.constant 239 : i32
    %88 = tpu.dynamic_rotate %51 by %c239_i32_42 dim 1 : vector<8x256xf32>, i32 -> vector<8x256xf32>
    %89 = vector.extract_strided_slice %0 {offsets = [7, 0], sizes = [1, 256], strides = [1, 1]} : vector<8x256xf32> to vector<1x256xf32>
    %90 = vector.broadcast %89 : vector<1x256xf32> to vector<8x256xf32>
    %91 = arith.mulf %88, %90 : vector<8x256xf32>
    %c64_43 = arith.constant 64 : index
    %c0_44 = arith.constant 0 : index
    %92 = vector.load %arg5[%c64_43, %c0_44] : memref<80x256xf32, #tpu.memory_space<vmem>>, vector<8x256xf32>
    tpu.vector_store %arg5[%c64_43, %c0_44], %91 {strides = array<i32>} : memref<80x256xf32, #tpu.memory_space<vmem>>, vector<8x256xf32>,
    %c0_45 = arith.constant 0 : index
    %c0_46 = arith.constant 0 : index
    %93 = vector.load %arg5[%c0_45, %c0_46] : memref<80x256xf32, #tpu.memory_space<vmem>>, vector<80x256xf32>
    %cst_47 = arith.constant dense<0.000000e+00> : vector<8x256xf32>
    %94 = tpu.matmul %3, %93, %cst_47 {dimension_numbers = #tpu.dot_dimension_numbers<[1], [0], [0], [1], [0, 0, 1, 1], [], []>} : vector<8x80xf32>, vector<80x256xf32>, vector<8x256xf32> -> vector<8x256xf32>
    %cst_48 = arith.constant 0.000000e+00 : f32
    %95 = vector.broadcast %cst_48 : f32 to vector<8x256xf32>
    %96 = arith.cmpf oge, %94, %95 : vector<8x256xf32>
    %cst_49 = arith.constant 0.00999999977 : f32
    %97 = vector.broadcast %cst_49 : f32 to vector<8x256xf32>
    %98 = arith.mulf %97, %94 : vector<8x256xf32>
    %99 = arith.select %96, %94, %98 : vector<8x256xi1>, vector<8x256xf32>
    %c17_i32_50 = arith.constant 17 : i32
    %100 = tpu.dynamic_rotate %99 by %c17_i32_50 dim 1 : vector<8x256xf32>, i32 -> vector<8x256xf32>
    %101 = vector.extract_strided_slice %0 {offsets = [0, 0], sizes = [1, 256], strides = [1, 1]} : vector<8x256xf32> to vector<1x256xf32>
    %102 = vector.broadcast %101 : vector<1x256xf32> to vector<8x256xf32>
    %103 = arith.mulf %100, %102 : vector<8x256xf32>
    %c0_51 = arith.constant 0 : index
    %c0_52 = arith.constant 0 : index
    %104 = vector.load %arg5[%c0_51, %c0_52] : memref<80x256xf32, #tpu.memory_space<vmem>>, vector<8x256xf32>
    tpu.vector_store %arg5[%c0_51, %c0_52], %103 {strides = array<i32>} : memref<80x256xf32, #tpu.memory_space<vmem>>, vector<8x256xf32>,
    %c16_i32_53 = arith.constant 16 : i32
    %105 = tpu.dynamic_rotate %99 by %c16_i32_53 dim 1 : vector<8x256xf32>, i32 -> vector<8x256xf32>
    %106 = vector.extract_strided_slice %0 {offsets = [1, 0], sizes = [1, 256], strides = [1, 1]} : vector<8x256xf32> to vector<1x256xf32>
    %107 = vector.broadcast %106 : vector<1x256xf32> to vector<8x256xf32>
    %108 = arith.mulf %105, %107 : vector<8x256xf32>
    %c8_54 = arith.constant 8 : index
    %c0_55 = arith.constant 0 : index
    %109 = vector.load %arg5[%c8_54, %c0_55] : memref<80x256xf32, #tpu.memory_space<vmem>>, vector<8x256xf32>
    tpu.vector_store %arg5[%c8_54, %c0_55], %108 {strides = array<i32>} : memref<80x256xf32, #tpu.memory_space<vmem>>, vector<8x256xf32>,
    %c15_i32_56 = arith.constant 15 : i32
    %110 = tpu.dynamic_rotate %99 by %c15_i32_56 dim 1 : vector<8x256xf32>, i32 -> vector<8x256xf32>
    %111 = vector.extract_strided_slice %0 {offsets = [2, 0], sizes = [1, 256], strides = [1, 1]} : vector<8x256xf32> to vector<1x256xf32>
    %112 = vector.broadcast %111 : vector<1x256xf32> to vector<8x256xf32>
    %113 = arith.mulf %110, %112 : vector<8x256xf32>
    %c16_57 = arith.constant 16 : index
    %c0_58 = arith.constant 0 : index
    %114 = vector.load %arg5[%c16_57, %c0_58] : memref<80x256xf32, #tpu.memory_space<vmem>>, vector<8x256xf32>
    tpu.vector_store %arg5[%c16_57, %c0_58], %113 {strides = array<i32>} : memref<80x256xf32, #tpu.memory_space<vmem>>, vector<8x256xf32>,
    %c1_i32_59 = arith.constant 1 : i32
    %115 = tpu.dynamic_rotate %99 by %c1_i32_59 dim 1 : vector<8x256xf32>, i32 -> vector<8x256xf32>
    %116 = vector.extract_strided_slice %0 {offsets = [3, 0], sizes = [1, 256], strides = [1, 1]} : vector<8x256xf32> to vector<1x256xf32>
    %117 = vector.broadcast %116 : vector<1x256xf32> to vector<8x256xf32>
    %118 = arith.mulf %115, %117 : vector<8x256xf32>
    %c24_60 = arith.constant 24 : index
    %c0_61 = arith.constant 0 : index
    %119 = vector.load %arg5[%c24_60, %c0_61] : memref<80x256xf32, #tpu.memory_space<vmem>>, vector<8x256xf32>
    tpu.vector_store %arg5[%c24_60, %c0_61], %118 {strides = array<i32>} : memref<80x256xf32, #tpu.memory_space<vmem>>, vector<8x256xf32>,
    %c32_62 = arith.constant 32 : index
    %c0_63 = arith.constant 0 : index
    %120 = vector.load %arg5[%c32_62, %c0_63] : memref<80x256xf32, #tpu.memory_space<vmem>>, vector<8x256xf32>
    tpu.vector_store %arg5[%c32_62, %c0_63], %99 {strides = array<i32>} : memref<80x256xf32, #tpu.memory_space<vmem>>, vector<8x256xf32>,
    %c255_i32_64 = arith.constant 255 : i32
    %121 = tpu.dynamic_rotate %99 by %c255_i32_64 dim 1 : vector<8x256xf32>, i32 -> vector<8x256xf32>
    %122 = vector.extract_strided_slice %0 {offsets = [4, 0], sizes = [1, 256], strides = [1, 1]} : vector<8x256xf32> to vector<1x256xf32>
    %123 = vector.broadcast %122 : vector<1x256xf32> to vector<8x256xf32>
    %124 = arith.mulf %121, %123 : vector<8x256xf32>
    %c40_65 = arith.constant 40 : index
    %c0_66 = arith.constant 0 : index
    %125 = vector.load %arg5[%c40_65, %c0_66] : memref<80x256xf32, #tpu.memory_space<vmem>>, vector<8x256xf32>
    tpu.vector_store %arg5[%c40_65, %c0_66], %124 {strides = array<i32>} : memref<80x256xf32, #tpu.memory_space<vmem>>, vector<8x256xf32>,
    %c241_i32_67 = arith.constant 241 : i32
    %126 = tpu.dynamic_rotate %99 by %c241_i32_67 dim 1 : vector<8x256xf32>, i32 -> vector<8x256xf32>
    %127 = vector.extract_strided_slice %0 {offsets = [5, 0], sizes = [1, 256], strides = [1, 1]} : vector<8x256xf32> to vector<1x256xf32>
    %128 = vector.broadcast %127 : vector<1x256xf32> to vector<8x256xf32>
    %129 = arith.mulf %126, %128 : vector<8x256xf32>
    %c48_68 = arith.constant 48 : index
    %c0_69 = arith.constant 0 : index
    %130 = vector.load %arg5[%c48_68, %c0_69] : memref<80x256xf32, #tpu.memory_space<vmem>>, vector<8x256xf32>
    tpu.vector_store %arg5[%c48_68, %c0_69], %129 {strides = array<i32>} : memref<80x256xf32, #tpu.memory_space<vmem>>, vector<8x256xf32>,
    %c240_i32_70 = arith.constant 240 : i32
    %131 = tpu.dynamic_rotate %99 by %c240_i32_70 dim 1 : vector<8x256xf32>, i32 -> vector<8x256xf32>
    %132 = vector.extract_strided_slice %0 {offsets = [6, 0], sizes = [1, 256], strides = [1, 1]} : vector<8x256xf32> to vector<1x256xf32>
    %133 = vector.broadcast %132 : vector<1x256xf32> to vector<8x256xf32>
    %134 = arith.mulf %131, %133 : vector<8x256xf32>
    %c56_71 = arith.constant 56 : index
    %c0_72 = arith.constant 0 : index
    %135 = vector.load %arg5[%c56_71, %c0_72] : memref<80x256xf32, #tpu.memory_space<vmem>>, vector<8x256xf32>
    tpu.vector_store %arg5[%c56_71, %c0_72], %134 {strides = array<i32>} : memref<80x256xf32, #tpu.memory_space<vmem>>, vector<8x256xf32>,
    %c239_i32_73 = arith.constant 239 : i32
    %136 = tpu.dynamic_rotate %99 by %c239_i32_73 dim 1 : vector<8x256xf32>, i32 -> vector<8x256xf32>
    %137 = vector.extract_strided_slice %0 {offsets = [7, 0], sizes = [1, 256], strides = [1, 1]} : vector<8x256xf32> to vector<1x256xf32>
    %138 = vector.broadcast %137 : vector<1x256xf32> to vector<8x256xf32>
    %139 = arith.mulf %136, %138 : vector<8x256xf32>
    %c64_74 = arith.constant 64 : index
    %c0_75 = arith.constant 0 : index
    %140 = vector.load %arg5[%c64_74, %c0_75] : memref<80x256xf32, #tpu.memory_space<vmem>>, vector<8x256xf32>
    tpu.vector_store %arg5[%c64_74, %c0_75], %139 {strides = array<i32>} : memref<80x256xf32, #tpu.memory_space<vmem>>, vector<8x256xf32>,
    %c0_76 = arith.constant 0 : index
    %c0_77 = arith.constant 0 : index
    %141 = vector.load %arg5[%c0_76, %c0_77] : memref<80x256xf32, #tpu.memory_space<vmem>>, vector<80x256xf32>
    %cst_78 = arith.constant dense<0.000000e+00> : vector<8x256xf32>
    %142 = tpu.matmul %4, %141, %cst_78 {dimension_numbers = #tpu.dot_dimension_numbers<[1], [0], [0], [1], [0, 0, 1, 1], [], []>} : vector<8x80xf32>, vector<80x256xf32>, vector<8x256xf32> -> vector<8x256xf32>
    %143 = arith.addf %51, %142 : vector<8x256xf32>
    %cst_79 = arith.constant 0.000000e+00 : f32
    %144 = vector.broadcast %cst_79 : f32 to vector<8x256xf32>
    %145 = arith.maximumf %143, %144 : vector<8x256xf32>
    %c17_i32_80 = arith.constant 17 : i32
    %146 = tpu.dynamic_rotate %145 by %c17_i32_80 dim 1 : vector<8x256xf32>, i32 -> vector<8x256xf32>
    %147 = vector.extract_strided_slice %0 {offsets = [0, 0], sizes = [1, 256], strides = [1, 1]} : vector<8x256xf32> to vector<1x256xf32>
    %148 = vector.broadcast %147 : vector<1x256xf32> to vector<8x256xf32>
    %149 = arith.mulf %146, %148 : vector<8x256xf32>
    %c0_81 = arith.constant 0 : index
    %c0_82 = arith.constant 0 : index
    %150 = vector.load %arg5[%c0_81, %c0_82] : memref<80x256xf32, #tpu.memory_space<vmem>>, vector<8x256xf32>
    tpu.vector_store %arg5[%c0_81, %c0_82], %149 {strides = array<i32>} : memref<80x256xf32, #tpu.memory_space<vmem>>, vector<8x256xf32>,
    %c16_i32_83 = arith.constant 16 : i32
    %151 = tpu.dynamic_rotate %145 by %c16_i32_83 dim 1 : vector<8x256xf32>, i32 -> vector<8x256xf32>
    %152 = vector.extract_strided_slice %0 {offsets = [1, 0], sizes = [1, 256], strides = [1, 1]} : vector<8x256xf32> to vector<1x256xf32>
    %153 = vector.broadcast %152 : vector<1x256xf32> to vector<8x256xf32>
    %154 = arith.mulf %151, %153 : vector<8x256xf32>
    %c8_84 = arith.constant 8 : index
    %c0_85 = arith.constant 0 : index
    %155 = vector.load %arg5[%c8_84, %c0_85] : memref<80x256xf32, #tpu.memory_space<vmem>>, vector<8x256xf32>
    tpu.vector_store %arg5[%c8_84, %c0_85], %154 {strides = array<i32>} : memref<80x256xf32, #tpu.memory_space<vmem>>, vector<8x256xf32>,
    %c15_i32_86 = arith.constant 15 : i32
    %156 = tpu.dynamic_rotate %145 by %c15_i32_86 dim 1 : vector<8x256xf32>, i32 -> vector<8x256xf32>
    %157 = vector.extract_strided_slice %0 {offsets = [2, 0], sizes = [1, 256], strides = [1, 1]} : vector<8x256xf32> to vector<1x256xf32>
    %158 = vector.broadcast %157 : vector<1x256xf32> to vector<8x256xf32>
    %159 = arith.mulf %156, %158 : vector<8x256xf32>
    %c16_87 = arith.constant 16 : index
    %c0_88 = arith.constant 0 : index
    %160 = vector.load %arg5[%c16_87, %c0_88] : memref<80x256xf32, #tpu.memory_space<vmem>>, vector<8x256xf32>
    tpu.vector_store %arg5[%c16_87, %c0_88], %159 {strides = array<i32>} : memref<80x256xf32, #tpu.memory_space<vmem>>, vector<8x256xf32>,
    %c1_i32_89 = arith.constant 1 : i32
    %161 = tpu.dynamic_rotate %145 by %c1_i32_89 dim 1 : vector<8x256xf32>, i32 -> vector<8x256xf32>
    %162 = vector.extract_strided_slice %0 {offsets = [3, 0], sizes = [1, 256], strides = [1, 1]} : vector<8x256xf32> to vector<1x256xf32>
    %163 = vector.broadcast %162 : vector<1x256xf32> to vector<8x256xf32>
    %164 = arith.mulf %161, %163 : vector<8x256xf32>
    %c24_90 = arith.constant 24 : index
    %c0_91 = arith.constant 0 : index
    %165 = vector.load %arg5[%c24_90, %c0_91] : memref<80x256xf32, #tpu.memory_space<vmem>>, vector<8x256xf32>
    tpu.vector_store %arg5[%c24_90, %c0_91], %164 {strides = array<i32>} : memref<80x256xf32, #tpu.memory_space<vmem>>, vector<8x256xf32>,
    %c32_92 = arith.constant 32 : index
    %c0_93 = arith.constant 0 : index
    %166 = vector.load %arg5[%c32_92, %c0_93] : memref<80x256xf32, #tpu.memory_space<vmem>>, vector<8x256xf32>
    tpu.vector_store %arg5[%c32_92, %c0_93], %145 {strides = array<i32>} : memref<80x256xf32, #tpu.memory_space<vmem>>, vector<8x256xf32>,
    %c255_i32_94 = arith.constant 255 : i32
    %167 = tpu.dynamic_rotate %145 by %c255_i32_94 dim 1 : vector<8x256xf32>, i32 -> vector<8x256xf32>
    %168 = vector.extract_strided_slice %0 {offsets = [4, 0], sizes = [1, 256], strides = [1, 1]} : vector<8x256xf32> to vector<1x256xf32>
    %169 = vector.broadcast %168 : vector<1x256xf32> to vector<8x256xf32>
    %170 = arith.mulf %167, %169 : vector<8x256xf32>
    %c40_95 = arith.constant 40 : index
    %c0_96 = arith.constant 0 : index
    %171 = vector.load %arg5[%c40_95, %c0_96] : memref<80x256xf32, #tpu.memory_space<vmem>>, vector<8x256xf32>
    tpu.vector_store %arg5[%c40_95, %c0_96], %170 {strides = array<i32>} : memref<80x256xf32, #tpu.memory_space<vmem>>, vector<8x256xf32>,
    %c241_i32_97 = arith.constant 241 : i32
    %172 = tpu.dynamic_rotate %145 by %c241_i32_97 dim 1 : vector<8x256xf32>, i32 -> vector<8x256xf32>
    %173 = vector.extract_strided_slice %0 {offsets = [5, 0], sizes = [1, 256], strides = [1, 1]} : vector<8x256xf32> to vector<1x256xf32>
    %174 = vector.broadcast %173 : vector<1x256xf32> to vector<8x256xf32>
    %175 = arith.mulf %172, %174 : vector<8x256xf32>
    %c48_98 = arith.constant 48 : index
    %c0_99 = arith.constant 0 : index
    %176 = vector.load %arg5[%c48_98, %c0_99] : memref<80x256xf32, #tpu.memory_space<vmem>>, vector<8x256xf32>
    tpu.vector_store %arg5[%c48_98, %c0_99], %175 {strides = array<i32>} : memref<80x256xf32, #tpu.memory_space<vmem>>, vector<8x256xf32>,
    %c240_i32_100 = arith.constant 240 : i32
    %177 = tpu.dynamic_rotate %145 by %c240_i32_100 dim 1 : vector<8x256xf32>, i32 -> vector<8x256xf32>
    %178 = vector.extract_strided_slice %0 {offsets = [6, 0], sizes = [1, 256], strides = [1, 1]} : vector<8x256xf32> to vector<1x256xf32>
    %179 = vector.broadcast %178 : vector<1x256xf32> to vector<8x256xf32>
    %180 = arith.mulf %177, %179 : vector<8x256xf32>
    %c56_101 = arith.constant 56 : index
    %c0_102 = arith.constant 0 : index
    %181 = vector.load %arg5[%c56_101, %c0_102] : memref<80x256xf32, #tpu.memory_space<vmem>>, vector<8x256xf32>
    tpu.vector_store %arg5[%c56_101, %c0_102], %180 {strides = array<i32>} : memref<80x256xf32, #tpu.memory_space<vmem>>, vector<8x256xf32>,
    %c239_i32_103 = arith.constant 239 : i32
    %182 = tpu.dynamic_rotate %145 by %c239_i32_103 dim 1 : vector<8x256xf32>, i32 -> vector<8x256xf32>
    %183 = vector.extract_strided_slice %0 {offsets = [7, 0], sizes = [1, 256], strides = [1, 1]} : vector<8x256xf32> to vector<1x256xf32>
    %184 = vector.broadcast %183 : vector<1x256xf32> to vector<8x256xf32>
    %185 = arith.mulf %182, %184 : vector<8x256xf32>
    %c64_104 = arith.constant 64 : index
    %c0_105 = arith.constant 0 : index
    %186 = vector.load %arg5[%c64_104, %c0_105] : memref<80x256xf32, #tpu.memory_space<vmem>>, vector<8x256xf32>
    tpu.vector_store %arg5[%c64_104, %c0_105], %185 {strides = array<i32>} : memref<80x256xf32, #tpu.memory_space<vmem>>, vector<8x256xf32>,
    %c0_106 = arith.constant 0 : index
    %c0_107 = arith.constant 0 : index
    %187 = vector.load %arg5[%c0_106, %c0_107] : memref<80x256xf32, #tpu.memory_space<vmem>>, vector<80x256xf32>
    %cst_108 = arith.constant dense<0.000000e+00> : vector<12x256xf32>
    %188 = tpu.matmul %5, %187, %cst_108 {dimension_numbers = #tpu.dot_dimension_numbers<[1], [0], [0], [1], [0, 0, 1, 1], [], []>} : vector<12x80xf32>, vector<80x256xf32>, vector<12x256xf32> -> vector<12x256xf32>
    %189 = math.tanh %188 : vector<12x256xf32>
    %c0_109 = arith.constant 0 : index
    %c0_110 = arith.constant 0 : index
    %190 = vector.load %arg4[%c0_109, %c0_110] : memref<12x256xf32, #tpu.memory_space<vmem>>, vector<12x256xf32>
    tpu.vector_store %arg4[%c0_109, %c0_110], %189 {strides = array<i32>} : memref<12x256xf32, #tpu.memory_space<vmem>>, vector<12x256xf32>,
    return
  }
  func.func @transform_0(%arg0: i32) -> (i32, i32) {
    %c0_i32 = arith.constant 0 : i32
    %c0_i32_0 = arith.constant 0 : i32
    return %c0_i32, %arg0 : i32, i32
  }
  func.func @transform_1(%arg0: i32) -> (i32, i32) {
    %c0_i32 = arith.constant 0 : i32
    %c0_i32_0 = arith.constant 0 : i32
    %c0_i32_1 = arith.constant 0 : i32
    return %c0_i32, %c0_i32_0 : i32, i32
  }
  func.func @transform_2(%arg0: i32) -> (i32, i32) {
    %c0_i32 = arith.constant 0 : i32
    %c0_i32_0 = arith.constant 0 : i32
    %c0_i32_1 = arith.constant 0 : i32
    return %c0_i32, %c0_i32_0 : i32, i32
  }
  func.func @transform_3(%arg0: i32) -> (i32, i32) {
    %c0_i32 = arith.constant 0 : i32
    %c0_i32_0 = arith.constant 0 : i32
    return %c0_i32, %arg0 : i32, i32
  }
}

</mosaic_0001>

<llo_original>
// kernel: generator_forward_pallas.1
$region0: #{generator_forward_pallas.1}
  #allocation0 [shape = 'u32[]', space=smem, size = 0x4, offset = 0x4, fixed_abs, tag = 'smem constant byte address 0x4 - core index']
  #allocation1 [shape = 'u32[144,128]{1,0:T(1,128)}', space=vmem, size = 0x12000, scoped, tag = 'internal scratch']
  #allocation2 [shape = 'f32[80,256]{1,0:T(8,128)}', space=vmem, size = 0x14000, scoped, tag = 'scratch operand']
  %s0 = inlined_call_operand.vmem [shape: f32[8,512], index: 0, kind: input, shape index: {}]
  %s1 = inlined_call_operand.vmem [shape: f32[8,256], index: 1, kind: input, shape index: {}]
  %s2 = inlined_call_operand.vmem [shape: f32[40,80], index: 2, kind: input, shape index: {}]
  %s3 = inlined_call_operand.vmem [shape: f32[12,512], index: 3, kind: output, shape index: {}]
  %s4 = sld [smem:[#allocation0]]
  $region64: #{generator_forward_pallas.1} parent=0
    _
  %s6 = ssub.s32 1, %s4
  %s7 = scalar_select 0, %s6, %s4
  $region1: #{generator_forward_pallas.1} parent=0
    #allocation3 [shape = 'u8[32768]{0}', space=vmem, size = 0x8000, scoped, tag = 'output window, operand 0']
    loop: start=0, step=1, limit=4
    $region2: #{generator_forward_pallas.1} parent=1 // loop_pre_header
      _
    $region3: #{generator_forward_pallas.1} parent=1 // loop_header
      %s9 = sphi 0, %s13
      %p10 = scmp.ge.s32.totalorder %s9, 4
      %s19 = sphi 0, %s21
      %s22 = sphi 0, %s19
      %s23 = sphi 0, %s22
      %s39 = sphi 0, %s23
      %s43 = sphi 0, %s43
      %s45 = sphi 0, %s43
      %s46 = sphi 0, %s45
      %s60 = sphi 0, %s46
      %s64 = sphi 0, %s64
      %s66 = sphi 0, %s64
      %s67 = sphi 0, %s66
      %s81 = sphi 0, %s67
      %s87 = sphi 0, %s89
      %s90 = sphi 0, %s87
      %s91 = sphi 0, %s90
      %s107 = sphi 0, %s91
    $region4: #{generator_forward_pallas.1} parent=1 // loop_header_branch
      %12 = sbr.rel (%p10) target = $region8
    $region5: #{generator_forward_pallas.1} parent=1 // loop_body
      %s14 = ssub.s32 %s9, 1
      %s15 = ssub.s32 %s9, 2
      %s16 = sadd.s32 %s9, 1
      %s17 = ssub.s32 %s9, %s16
      %p18 = scmp.eq.s32.totalorder %s17, 0
      %s20 = sadd.s32 %s19, 1
      %s21 = scalar_select %p18, %s19, %s20
      %p24 = pneg %p18
      %p25 = scmp.eq.s32.totalorder %s9, 1
      %p26 = por %p24, %p25
      %p27 = scmp.ne.s32.totalorder %s19, %s22
      %p28 = scmp.eq.s32.totalorder %s9, 0
      %p29 = por %p27, %p28
      %p30 = scmp.ne.s32.totalorder %s19, %s22
      %p31 = scmp.eq.s32.totalorder %s14, 1
      %p32 = por %p30, %p31
      %p33 = scmp.ne.s32.totalorder %s22, %s23
      %p34 = scmp.eq.s32.totalorder %s14, 0
      %p35 = por %p33, %p34
      %p36 = scmp.ne.s32.totalorder %s22, %s23
      %p37 = scmp.eq.s32.totalorder %s15, 1
      %p38 = por %p36, %p37
      %p40 = scmp.ne.s32.totalorder %s23, %s39
      %p41 = scmp.eq.s32.totalorder %s15, 0
      %p42 = por %p40, %p41
      %s44 = sadd.s32 %s43, 1
      %p47 = scmp.eq.s32.totalorder %s9, 1
      %p48 = scmp.ne.s32.totalorder %s43, %s45
      %p49 = scmp.eq.s32.totalorder %s9, 0
      %p50 = por %p48, %p49
      %p51 = scmp.ne.s32.totalorder %s43, %s45
      %p52 = scmp.eq.s32.totalorder %s14, 1
      %p53 = por %p51, %p52
      %p54 = scmp.ne.s32.totalorder %s45, %s46
      %p55 = scmp.eq.s32.totalorder %s14, 0
      %p56 = por %p54, %p55
      %p57 = scmp.ne.s32.totalorder %s45, %s46
      %p58 = scmp.eq.s32.totalorder %s15, 1
      %p59 = por %p57, %p58
      %p61 = scmp.ne.s32.totalorder %s46, %s60
      %p62 = scmp.eq.s32.totalorder %s15, 0
      %p63 = por %p61, %p62
      %s65 = sadd.s32 %s64, 1
      %p68 = scmp.eq.s32.totalorder %s9, 1
      %p69 = scmp.ne.s32.totalorder %s64, %s66
      %p70 = scmp.eq.s32.totalorder %s9, 0
      %p71 = por %p69, %p70
      %p72 = scmp.ne.s32.totalorder %s64, %s66
      %p73 = scmp.eq.s32.totalorder %s14, 1
      %p74 = por %p72, %p73
      %p75 = scmp.ne.s32.totalorder %s66, %s67
      %p76 = scmp.eq.s32.totalorder %s14, 0
      %p77 = por %p75, %p76
      %p78 = scmp.ne.s32.totalorder %s66, %s67
      %p79 = scmp.eq.s32.totalorder %s15, 1
      %p80 = por %p78, %p79
      %p82 = scmp.ne.s32.totalorder %s67, %s81
      %p83 = scmp.eq.s32.totalorder %s15, 0
      %p84 = por %p82, %p83
      %s85 = ssub.s32 %s9, %s16
      %p86 = scmp.eq.s32.totalorder %s85, 0
      %s88 = sadd.s32 %s87, 1
      %s89 = scalar_select %p86, %s87, %s88
      %p92 = pneg %p86
      %p93 = scmp.eq.s32.totalorder %s9, 1
      %p94 = por %p92, %p93
      %p95 = scmp.ne.s32.totalorder %s87, %s90
      %p96 = scmp.eq.s32.totalorder %s9, 0
      %p97 = por %p95, %p96
      %p98 = scmp.ne.s32.totalorder %s87, %s90
      %p99 = scmp.eq.s32.totalorder %s14, 1
      %p100 = por %p98, %p99
      %p101 = scmp.ne.s32.totalorder %s90, %s91
      %p102 = scmp.eq.s32.totalorder %s14, 0
      %p103 = por %p101, %p102
      %p104 = scmp.ne.s32.totalorder %s90, %s91
      %p105 = scmp.eq.s32.totalorder %s15, 1
      %p106 = por %p104, %p105
      %p108 = scmp.ne.s32.totalorder %s91, %s107
      %p109 = scmp.eq.s32.totalorder %s15, 0
      %p110 = por %p108, %p109
      %p111 = scmp.le.s32.totalorder 1, %s9
      %p112 = scmp.lt.s32.totalorder %s9, 3
      %p113 = pnand %p111, %p112
      %p114 = pneg %p113
      // Predicated region
      $region9: #{generator_forward_pallas.1} parent=5 // pred_check
        _
      $region10: #{generator_forward_pallas.1} parent=5 // pred_check_branch
        %116 = sbr.rel (%p113) target = $region12
      $region11: #{generator_forward_pallas.1} parent=5 // pred_region
        %s117 = ssub.s32 %s9, 1
        // Predicated region
        $region13: #{generator_forward_pallas.1} parent=11 // pred_check
          %p118 = pneg %p56
        $region14: #{generator_forward_pallas.1} parent=11 // pred_check_branch
          %120 = sbr.rel (%p118) target = $region16
        $region15: #{generator_forward_pallas.1} parent=11 // pred_region
          _
        $region16: #{generator_forward_pallas.1} parent=11 // pred_fallthru
          _
        // Predicated region
        $region17: #{generator_forward_pallas.1} parent=11 // pred_check
          %p121 = pneg %p77
        $region18: #{generator_forward_pallas.1} parent=11 // pred_check_branch
          %123 = sbr.rel (%p121) target = $region20
        $region19: #{generator_forward_pallas.1} parent=11 // pred_region
          _
        $region20: #{generator_forward_pallas.1} parent=11 // pred_fallthru
          _
      $region12: #{generator_forward_pallas.1} parent=5 // pred_fallthru
        _
      %p124 = scmp.lt.s32.totalorder %s9, 2
      // Predicated region
      $region21: #{generator_forward_pallas.1} parent=5 // pred_check
        %p125 = pneg %p124
      $region22: #{generator_forward_pallas.1} parent=5 // pred_check_branch
        %127 = sbr.rel (%p125) target = $region24
      $region23: #{generator_forward_pallas.1} parent=5 // pred_region
        // Predicated region
        $region25: #{generator_forward_pallas.1} parent=23 // pred_check
          %p128 = pneg %p29
        $region26: #{generator_forward_pallas.1} parent=23 // pred_check_branch
          %130 = sbr.rel (%p128) target = $region28
        $region27: #{generator_forward_pallas.1} parent=23 // pred_region
          %s131 = smul.u32 2, %s9
          %p132 = scmp.lt.s32.totalorder %s131, 3
          %s133 = scalar_select %p132, %s131, 3
          %s134 = smul.addr %s133, 8
          %s135 = scalar_lea.vmem %s0, %s134
          %s136 = smul.u32 2, %s9
        $region28: #{generator_forward_pallas.1} parent=23 // pred_fallthru
          _
      $region24: #{generator_forward_pallas.1} parent=5 // pred_fallthru
        _
      %p137 = scmp.le.s32.totalorder 1, %s9
      %p138 = scmp.lt.s32.totalorder %s9, 3
      %p139 = pnand %p137, %p138
      %p140 = pneg %p139
      // Predicated region
      $region29: #{generator_forward_pallas.1} parent=5 // pred_check
        _
      $region30: #{generator_forward_pallas.1} parent=5 // pred_check_branch
        %142 = sbr.rel (%p139) target = $region32
      $region31: #{generator_forward_pallas.1} parent=5 // pred_region
        %s143 = ssub.s32 %s9, 1
        %s144 = smul.u32 2, %s14
        %p145 = scmp.lt.s32.totalorder %s144, 3
        %s146 = scalar_select %p145, %s144, 3
        %s147 = smul.addr %s146, 8
        %s148 = scalar_lea.vmem %s0, %s147
        %p149 = pneg %p35
        %p150 = pneg %p32
        %p151 = pneg %p56
        %p152 = pneg %p53
        %p153 = pneg %p77
        %p154 = pneg %p74
        %p155 = pneg %p103
        %p156 = pneg %p100
        %s157 = sand.u32 %s90, 1
        %s158 = sand.u32 %s90, 1
        %s159 = smul.addr %s158, 32
        %s160 = scalar_lea.vmem [#allocation3], %s159
        %s161 = smul.u32 2, %s14
        %p162 = scmp.lt.s32.totalorder %s161, 3
        %s163 = scalar_select %p162, %s161, 3
        %s164 = smul.addr %s163, 8
        %s165 = scalar_lea.vmem %s0, %s164
        %s166 = smul.u32 2, %s14
        %s167 = smul.u32 2, %s14
        %v168 = vld [vmem:[%s1] sm:$0xff]
        %v169 = vld [vmem:[%s1 + $0x8] sm:$0xff]
        %v170 = vld [vmem:[%s2] sm:$0xff]
        %v171 = vld [vmem:[%s2 + $0x8] sm:$0xff]
        %v172 = vld [vmem:[%s2 + $0x10] sm:$0xff]
        %v173 = vld [vmem:[%s2 + $0x18] sm:$0xff]
        %v174 = vld [vmem:[%s2 + $0x20] sm:$0xff]
        %175 = vst [vmem:[#allocation2 + $0x90] sm:$0xff] 1.0
        %176 = vst [vmem:[#allocation2 + $0x98] sm:$0xff] 1.0
        %v177 = vld [vmem:[%s165] sm:$0xff]
        %v178 = vld [vmem:[%s165 + $0x8] sm:$0xff]
        %179 = vrot.lane.b32.xlu0 %v177, 17
        %v180 = vpop.permute.xlu0 %179
        %181 = vrot.lane.b32.xlu0 %v178, 17
        %v182 = vpop.permute.xlu0 %181
        %v183 = vlaneseq
        %v184 = vand.u32 %v183, 127
        %vm185 = vcmp.lt.s32.totalorder %v184, 17
        %v186 = vsel %vm185, %v180, %v182
        %v187 = vsel %vm185, %v182, %v180
        %v188 = vlaneseq
        %v189 = vshrl.u32 %v188, 7
        %v190 = vsub.s32 0, %v189
        %v191 = vrot.slane %v168, %v190
        %v192 = vlaneseq
        %v193 = vshrl.u32 %v192, 7
        %v194 = vsub.s32 0, %v193
        %v195 = vrot.slane %v169, %v194
        %v196 = vmul.f32 %v187, %v191
        %v197 = vmul.f32 %v186, %v195
        %198 = vst [vmem:[#allocation2] sm:$0xff] %v196
        %199 = vst [vmem:[#allocation2 + $0x8] sm:$0xff] %v197
        %200 = vrot.lane.b32.xlu0 %v177, 16
        %v201 = vpop.permute.xlu0 %200
        %202 = vrot.lane.b32.xlu0 %v178, 16
        %v203 = vpop.permute.xlu0 %202
        %vm204 = vcmp.lt.s32.totalorder %v184, 16
        %v205 = vsel %vm204, %v201, %v203
        %v206 = vsel %vm204, %v203, %v201
        %v207 = vlaneseq
        %v208 = vshrl.u32 %v207, 7
        %v209 = vsub.s32 1, %v208
        %v210 = vrot.slane %v168, %v209
        %v211 = vlaneseq
        %v212 = vshrl.u32 %v211, 7
        %v213 = vsub.s32 1, %v212
        %v214 = vrot.slane %v169, %v213
        %v215 = vmul.f32 %v206, %v210
        %v216 = vmul.f32 %v205, %v214
        %217 = vst [vmem:[#allocation2 + $0x10] sm:$0xff] %v215
        %218 = vst [vmem:[#allocation2 + $0x18] sm:$0xff] %v216
        %219 = vrot.lane.b32.xlu0 %v177, 15
        %v220 = vpop.permute.xlu0 %219
        %221 = vrot.lane.b32.xlu0 %v178, 15
        %v222 = vpop.permute.xlu0 %221
        %vm223 = vcmp.lt.s32.totalorder %v184, 15
        %v224 = vsel %vm223, %v220, %v222
        %v225 = vsel %vm223, %v222, %v220
        %v226 = vlaneseq
        %v227 = vshrl.u32 %v226, 7
        %v228 = vsub.s32 2, %v227
        %v229 = vrot.slane %v168, %v228
        %v230 = vlaneseq
        %v231 = vshrl.u32 %v230, 7
        %v232 = vsub.s32 2, %v231
        %v233 = vrot.slane %v169, %v232
        %v234 = vmul.f32 %v225, %v229
        %v235 = vmul.f32 %v224, %v233
        %236 = vst [vmem:[#allocation2 + $0x20] sm:$0xff] %v234
        %237 = vst [vmem:[#allocation2 + $0x28] sm:$0xff] %v235
        %238 = vrot.lane.b32.xlu0 %v177, 1
        %v239 = vpop.permute.xlu0 %238
        %240 = vrot.lane.b32.xlu0 %v178, 1
        %v241 = vpop.permute.xlu0 %240
        %vm242 = vcmp.lt.s32.totalorder %v184, 1
        %v243 = vsel %vm242, %v239, %v241
        %v244 = vsel %vm242, %v241, %v239
        %v245 = vlaneseq
        %v246 = vshrl.u32 %v245, 7
        %v247 = vsub.s32 3, %v246
        %v248 = vrot.slane %v168, %v247
        %v249 = vlaneseq
        %v250 = vshrl.u32 %v249, 7
        %v251 = vsub.s32 3, %v250
        %v252 = vrot.slane %v169, %v251
        %v253 = vmul.f32 %v244, %v248
        %v254 = vmul.f32 %v243, %v252
        %255 = vst [vmem:[#allocation2 + $0x30] sm:$0xff] %v253
        %256 = vst [vmem:[#allocation2 + $0x38] sm:$0xff] %v254
        %257 = vst [vmem:[#allocation2 + $0x40] sm:$0xff] %v177
        %258 = vst [vmem:[#allocation2 + $0x48] sm:$0xff] %v178
        %259 = vrot.lane.b32.xlu0 %v177, 127
        %v260 = vpop.permute.xlu0 %259
        %261 = vrot.lane.b32.xlu0 %v178, 127
        %v262 = vpop.permute.xlu0 %261
        %vm263 = vcmp.lt.s32.totalorder %v184, 127
        %v264 = vsel %vm263, %v260, %v262
        %v265 = vsel %vm263, %v262, %v260
        %v266 = vlaneseq
        %v267 = vshrl.u32 %v266, 7
        %v268 = vsub.s32 4, %v267
        %v269 = vrot.slane %v168, %v268
        %v270 = vlaneseq
        %v271 = vshrl.u32 %v270, 7
        %v272 = vsub.s32 4, %v271
        %v273 = vrot.slane %v169, %v272
        %v274 = vmul.f32 %v264, %v269
        %v275 = vmul.f32 %v265, %v273
        %276 = vst [vmem:[#allocation2 + $0x50] sm:$0xff] %v274
        %277 = vst [vmem:[#allocation2 + $0x58] sm:$0xff] %v275
        %278 = vrot.lane.b32.xlu0 %v177, 113
        %v279 = vpop.permute.xlu0 %278
        %280 = vrot.lane.b32.xlu0 %v178, 113
        %v281 = vpop.permute.xlu0 %280
        %vm282 = vcmp.lt.s32.totalorder %v184, 113
        %v283 = vsel %vm282, %v279, %v281
        %v284 = vsel %vm282, %v281, %v279
        %v285 = vlaneseq
        %v286 = vshrl.u32 %v285, 7
        %v287 = vsub.s32 5, %v286
        %v288 = vrot.slane %v168, %v287
        %v289 = vlaneseq
        %v290 = vshrl.u32 %v289, 7
        %v291 = vsub.s32 5, %v290
        %v292 = vrot.slane %v169, %v291
        %v293 = vmul.f32 %v283, %v288
        %v294 = vmul.f32 %v284, %v292
        %295 = vst [vmem:[#allocation2 + $0x60] sm:$0xff] %v293
        %296 = vst [vmem:[#allocation2 + $0x68] sm:$0xff] %v294
        %297 = vrot.lane.b32.xlu0 %v177, 112
        %v298 = vpop.permute.xlu0 %297
        %299 = vrot.lane.b32.xlu0 %v178, 112
        %v300 = vpop.permute.xlu0 %299
        %vm301 = vcmp.lt.s32.totalorder %v184, 112
        %v302 = vsel %vm301, %v298, %v300
        %v303 = vsel %vm301, %v300, %v298
        %v304 = vlaneseq
        %v305 = vshrl.u32 %v304, 7
        %v306 = vsub.s32 6, %v305
        %v307 = vrot.slane %v168, %v306
        %v308 = vlaneseq
        %v309 = vshrl.u32 %v308, 7
        %v310 = vsub.s32 6, %v309
        %v311 = vrot.slane %v169, %v310
        %v312 = vmul.f32 %v302, %v307
        %v313 = vmul.f32 %v303, %v311
        %314 = vst [vmem:[#allocation2 + $0x70] sm:$0xff] %v312
        %315 = vst [vmem:[#allocation2 + $0x78] sm:$0xff] %v313
        %316 = vrot.lane.b32.xlu0 %v177, 111
        %v317 = vpop.permute.xlu0 %316
        %318 = vrot.lane.b32.xlu0 %v178, 111
        %v319 = vpop.permute.xlu0 %318
        %vm320 = vcmp.lt.s32.totalorder %v184, 111
        %v321 = vsel %vm320, %v317, %v319
        %v322 = vsel %vm320, %v319, %v317
        %v323 = vlaneseq
        %v324 = vshrl.u32 %v323, 7
        %v325 = vsub.s32 7, %v324
        %v326 = vrot.slane %v168, %v325
        %v327 = vlaneseq
        %v328 = vshrl.u32 %v327, 7
        %v329 = vsub.s32 7, %v328
        %v330 = vrot.slane %v169, %v329
        %v331 = vmul.f32 %v321, %v326
        %v332 = vmul.f32 %v322, %v330
        %333 = vst [vmem:[#allocation2 + $0x80] sm:$0xff] %v331
        %334 = vst [vmem:[#allocation2 + $0x88] sm:$0xff] %v332
        %v335 = vld [vmem:[#allocation2] sm:$0xff]
        %v336 = vld [vmem:[#allocation2 + $0x8] sm:$0xff]
        %v337 = vld [vmem:[#allocation2 + $0x10] sm:$0xff]
        %v338 = vld [vmem:[#allocation2 + $0x18] sm:$0xff]
        %v339 = vld [vmem:[#allocation2 + $0x20] sm:$0xff]
        %v340 = vld [vmem:[#allocation2 + $0x28] sm:$0xff]
        %v341 = vld [vmem:[#allocation2 + $0x30] sm:$0xff]
        %v342 = vld [vmem:[#allocation2 + $0x38] sm:$0xff]
        %v343 = vld [vmem:[#allocation2 + $0x40] sm:$0xff]
        %v344 = vld [vmem:[#allocation2 + $0x48] sm:$0xff]
        %v345 = vld [vmem:[#allocation2 + $0x50] sm:$0xff]
        %v346 = vld [vmem:[#allocation2 + $0x58] sm:$0xff]
        %v347 = vld [vmem:[#allocation2 + $0x60] sm:$0xff]
        %v348 = vld [vmem:[#allocation2 + $0x68] sm:$0xff]
        %v349 = vld [vmem:[#allocation2 + $0x70] sm:$0xff]
        %v350 = vld [vmem:[#allocation2 + $0x78] sm:$0xff]
        %v351 = vld [vmem:[#allocation2 + $0x80] sm:$0xff]
        %v352 = vld [vmem:[#allocation2 + $0x88] sm:$0xff]
        %v353 = vld [vmem:[#allocation2 + $0x90] sm:$0xff]
        %v354 = vld [vmem:[#allocation2 + $0x98] sm:$0xff]
        %vm355 = vcmask 654336
        %v357 = vsel %vm355, %v170, 0
        %359 = vmatprep.subr.mxu0 %v336
        %360 = vmatpush1.msra.mxu0 %v335
        %361 = vmatprep.subr.mxu0 %v338
        %362 = vmatpush1.msra.mxu0 %v337
        %363 = vmatprep.subr.mxu0 %v340
        %364 = vmatpush1.msra.mxu0 %v339
        %365 = vmatprep.subr.mxu0 %v342
        %366 = vmatpush1.msra.mxu0 %v341
        %367 = vmatprep.subr.mxu0 %v344
        %368 = vmatpush1.msra.mxu0 %v343
        %369 = vmatprep.subr.mxu0 %v346
        %370 = vmatpush1.msra.mxu0 %v345
        %371 = vmatprep.subr.mxu0 %v348
        %372 = vmatpush1.msra.mxu0 %v347
        %373 = vmatprep.subr.mxu0 %v350
        %374 = vmatpush1.msra.mxu0 %v349
        %375 = vmatprep.subr.mxu0 %v352
        %376 = vmatpush1.msra.mxu0 %v351
        %377 = vmatprep.subr.mxu0 %v354
        %378 = vmatpush1.msra.mxu0 %v353
        %379 = vmatprep.subr.mxu0 0.0
        %380 = vmatpush1.msra.mxu0 0.0
        %381 = vmatprep.subr.mxu0 0.0
        %382 = vmatpush1.msra.mxu0 0.0
        %383 = vmatprep.subr.mxu0 0.0
        %384 = vmatpush1.msra.mxu0 0.0
        %385 = vmatprep.subr.mxu0 0.0
        %386 = vmatpush1.msra.mxu0 0.0
        %387 = vmatprep.subr.mxu0 0.0
        %388 = vmatpush1.msra.mxu0 0.0
        %389 = vmatprep.subr.mxu0 0.0
        %390 = vmatpush1.msra.mxu0 0.0
        %391 = vmatprep.subr.mxu0 0.0
        %392 = vmatpush1.msra.mxu0 0.0
        %393 = vmatprep.subr.mxu0 0.0
        %394 = vmatpush1.msra.mxu0 0.0
        %395 = vmatprep.subr.mxu0 0.0
        %396 = vmatpush1.msra.mxu0 0.0
        %397 = vmatprep.subr.mxu0 0.0
        %398 = vmatpush1.msra.mxu0 0.0
        %399 = vmatprep.subr.mxu0 0.0
        %400 = vmatpush1.msra.mxu0 0.0
        %401 = vmatprep.subr.mxu0 0.0
        %402 = vmatpush1.msra.mxu0 0.0
        %403 = vmatprep.subr.mxu0 0.0
        %404 = vmatpush1.msra.mxu0 0.0
        %405 = vmatprep.subr.mxu0 0.0
        %406 = vmatpush1.msra.mxu0 0.0
        %407 = vmatprep.subr.mxu0 0.0
        %408 = vmatpush1.msra.mxu0 0.0
        %409 = vmatprep.subr.mxu0 0.0
        %410 = vmatpush1.msra.mxu0 0.0
        %411 = vmatprep.subr.mxu0 0.0
        %412 = vmatpush1.msra.mxu0 0.0
        %413 = vmatprep.subr.mxu0 0.0
        %414 = vmatpush1.msra.mxu0 0.0
        %415 = vmatprep.subr.mxu0 0.0
        %416 = vmatpush1.msra.mxu0 0.0
        %417 = vmatprep.subr.mxu0 0.0
        %418 = vmatpush1.msra.mxu0 0.0
        %419 = vmatprep.subr.mxu0 0.0
        %420 = vmatpush1.msra.mxu0 0.0
        %421 = vmatprep.subr.mxu0 0.0
        %422 = vmatpush1.msra.mxu0 0.0
        %423 = vmatprep.mubr.f32.mxu0 0.0
        %424 = vmatmul.mubr.f32.gmra.mrb[0].mxu0 %v357
        %v425 = vpop.f32.mrb[0].mxu0
        %v426 = vadd.f32 0.0, %v425
        %v427 = vpop.f32.mrb[0].mxu0
        %v428 = vadd.f32 0.0, %v427
        %429 = vdwg.mxu0
        %430 = vrot.lane.b32.xlu0 %v426, 17
        %v431 = vpop.permute.xlu0 %430
        %432 = vrot.lane.b32.xlu0 %v428, 17
        %v433 = vpop.permute.xlu0 %432
        %v434 = vsel %vm185, %v431, %v433
        %v435 = vsel %vm185, %v433, %v431
        %v436 = vmul.f32 %v435, %v191
        %v437 = vmul.f32 %v434, %v195
        %438 = vst [vmem:[#allocation2] sm:$0xff] %v436
        %439 = vst [vmem:[#allocation2 + $0x8] sm:$0xff] %v437
        %440 = vrot.lane.b32.xlu0 %v426, 16
        %v441 = vpop.permute.xlu0 %440
        %442 = vrot.lane.b32.xlu0 %v428, 16
        %v443 = vpop.permute.xlu0 %442
        %v444 = vsel %vm204, %v441, %v443
        %v445 = vsel %vm204, %v443, %v441
        %v446 = vmul.f32 %v445, %v210
        %v447 = vmul.f32 %v444, %v214
        %448 = vst [vmem:[#allocation2 + $0x10] sm:$0xff] %v446
        %449 = vst [vmem:[#allocation2 + $0x18] sm:$0xff] %v447
        %450 = vrot.lane.b32.xlu0 %v426, 15
        %v451 = vpop.permute.xlu0 %450
        %452 = vrot.lane.b32.xlu0 %v428, 15
        %v453 = vpop.permute.xlu0 %452
        %v454 = vsel %vm223, %v451, %v453
        %v455 = vsel %vm223, %v453, %v451
        %v456 = vmul.f32 %v455, %v229
        %v457 = vmul.f32 %v454, %v233
        %458 = vst [vmem:[#allocation2 + $0x20] sm:$0xff] %v456
        %459 = vst [vmem:[#allocation2 + $0x28] sm:$0xff] %v457
        %460 = vrot.lane.b32.xlu0 %v426, 1
        %v461 = vpop.permute.xlu0 %460
        %462 = vrot.lane.b32.xlu0 %v428, 1
        %v463 = vpop.permute.xlu0 %462
        %v464 = vsel %vm242, %v461, %v463
        %v465 = vsel %vm242, %v463, %v461
        %v466 = vmul.f32 %v465, %v248
        %v467 = vmul.f32 %v464, %v252
        %468 = vst [vmem:[#allocation2 + $0x30] sm:$0xff] %v466
        %469 = vst [vmem:[#allocation2 + $0x38] sm:$0xff] %v467
        %470 = vst [vmem:[#allocation2 + $0x40] sm:$0xff] %v426
        %471 = vst [vmem:[#allocation2 + $0x48] sm:$0xff] %v428
        %472 = vrot.lane.b32.xlu0 %v426, 127
        %v473 = vpop.permute.xlu0 %472
        %474 = vrot.lane.b32.xlu0 %v428, 127
        %v475 = vpop.permute.xlu0 %474
        %v476 = vsel %vm263, %v473, %v475
        %v477 = vsel %vm263, %v475, %v473
        %v478 = vmul.f32 %v476, %v269
        %v479 = vmul.f32 %v477, %v273
        %480 = vst [vmem:[#allocation2 + $0x50] sm:$0xff] %v478
        %481 = vst [vmem:[#allocation2 + $0x58] sm:$0xff] %v479
        %482 = vrot.lane.b32.xlu0 %v426, 113
        %v483 = vpop.permute.xlu0 %482
        %484 = vrot.lane.b32.xlu0 %v428, 113
        %v485 = vpop.permute.xlu0 %484
        %v486 = vsel %vm282, %v483, %v485
        %v487 = vsel %vm282, %v485, %v483
        %v488 = vmul.f32 %v486, %v288
        %v489 = vmul.f32 %v487, %v292
        %490 = vst [vmem:[#allocation2 + $0x60] sm:$0xff] %v488
        %491 = vst [vmem:[#allocation2 + $0x68] sm:$0xff] %v489
        %492 = vrot.lane.b32.xlu0 %v426, 112
        %v493 = vpop.permute.xlu0 %492
        %494 = vrot.lane.b32.xlu0 %v428, 112
        %v495 = vpop.permute.xlu0 %494
        %v496 = vsel %vm301, %v493, %v495
        %v497 = vsel %vm301, %v495, %v493
        %v498 = vmul.f32 %v496, %v307
        %v499 = vmul.f32 %v497, %v311
        %500 = vst [vmem:[#allocation2 + $0x70] sm:$0xff] %v498
        %501 = vst [vmem:[#allocation2 + $0x78] sm:$0xff] %v499
        %502 = vrot.lane.b32.xlu0 %v426, 111
        %v503 = vpop.permute.xlu0 %502
        %504 = vrot.lane.b32.xlu0 %v428, 111
        %v505 = vpop.permute.xlu0 %504
        %v506 = vsel %vm320, %v503, %v505
        %v507 = vsel %vm320, %v505, %v503
        %v508 = vmul.f32 %v506, %v326
        %v509 = vmul.f32 %v507, %v330
        %510 = vst [vmem:[#allocation2 + $0x80] sm:$0xff] %v508
        %511 = vst [vmem:[#allocation2 + $0x88] sm:$0xff] %v509
        %v512 = vld [vmem:[#allocation2] sm:$0xff]
        %v513 = vld [vmem:[#allocation2 + $0x8] sm:$0xff]
        %v514 = vld [vmem:[#allocation2 + $0x10] sm:$0xff]
        %v515 = vld [vmem:[#allocation2 + $0x18] sm:$0xff]
        %v516 = vld [vmem:[#allocation2 + $0x20] sm:$0xff]
        %v517 = vld [vmem:[#allocation2 + $0x28] sm:$0xff]
        %v518 = vld [vmem:[#allocation2 + $0x30] sm:$0xff]
        %v519 = vld [vmem:[#allocation2 + $0x38] sm:$0xff]
        %v520 = vld [vmem:[#allocation2 + $0x40] sm:$0xff]
        %v521 = vld [vmem:[#allocation2 + $0x48] sm:$0xff]
        %v522 = vld [vmem:[#allocation2 + $0x50] sm:$0xff]
        %v523 = vld [vmem:[#allocation2 + $0x58] sm:$0xff]
        %v524 = vld [vmem:[#allocation2 + $0x60] sm:$0xff]
        %v525 = vld [vmem:[#allocation2 + $0x68] sm:$0xff]
        %v526 = vld [vmem:[#allocation2 + $0x70] sm:$0xff]
        %v527 = vld [vmem:[#allocation2 + $0x78] sm:$0xff]
        %v528 = vld [vmem:[#allocation2 + $0x80] sm:$0xff]
        %v529 = vld [vmem:[#allocation2 + $0x88] sm:$0xff]
        %v530 = vld [vmem:[#allocation2 + $0x90] sm:$0xff]
        %v531 = vld [vmem:[#allocation2 + $0x98] sm:$0xff]
        %v533 = vsel %vm355, %v171, 0
        %535 = vmatprep.subr.mxu0 %v513
        %536 = vmatpush1.msra.mxu0 %v512
        %537 = vmatprep.subr.mxu0 %v515
        %538 = vmatpush1.msra.mxu0 %v514
        %539 = vmatprep.subr.mxu0 %v517
        %540 = vmatpush1.msra.mxu0 %v516
        %541 = vmatprep.subr.mxu0 %v519
        %542 = vmatpush1.msra.mxu0 %v518
        %543 = vmatprep.subr.mxu0 %v521
        %544 = vmatpush1.msra.mxu0 %v520
        %545 = vmatprep.subr.mxu0 %v523
        %546 = vmatpush1.msra.mxu0 %v522
        %547 = vmatprep.subr.mxu0 %v525
        %548 = vmatpush1.msra.mxu0 %v524
        %549 = vmatprep.subr.mxu0 %v527
        %550 = vmatpush1.msra.mxu0 %v526
        %551 = vmatprep.subr.mxu0 %v529
        %552 = vmatpush1.msra.mxu0 %v528
        %553 = vmatprep.subr.mxu0 %v531
        %554 = vmatpush1.msra.mxu0 %v530
        %555 = vmatprep.subr.mxu0 0.0
        %556 = vmatpush1.msra.mxu0 0.0
        %557 = vmatprep.subr.mxu0 0.0
        %558 = vmatpush1.msra.mxu0 0.0
        %559 = vmatprep.subr.mxu0 0.0
        %560 = vmatpush1.msra.mxu0 0.0
        %561 = vmatprep.subr.mxu0 0.0
        %562 = vmatpush1.msra.mxu0 0.0
        %563 = vmatprep.subr.mxu0 0.0
        %564 = vmatpush1.msra.mxu0 0.0
        %565 = vmatprep.subr.mxu0 0.0
        %566 = vmatpush1.msra.mxu0 0.0
        %567 = vmatprep.subr.mxu0 0.0
        %568 = vmatpush1.msra.mxu0 0.0
        %569 = vmatprep.subr.mxu0 0.0
        %570 = vmatpush1.msra.mxu0 0.0
        %571 = vmatprep.subr.mxu0 0.0
        %572 = vmatpush1.msra.mxu0 0.0
        %573 = vmatprep.subr.mxu0 0.0
        %574 = vmatpush1.msra.mxu0 0.0
        %575 = vmatprep.subr.mxu0 0.0
        %576 = vmatpush1.msra.mxu0 0.0
        %577 = vmatprep.subr.mxu0 0.0
        %578 = vmatpush1.msra.mxu0 0.0
        %579 = vmatprep.subr.mxu0 0.0
        %580 = vmatpush1.msra.mxu0 0.0
        %581 = vmatprep.subr.mxu0 0.0
        %582 = vmatpush1.msra.mxu0 0.0
        %583 = vmatprep.subr.mxu0 0.0
        %584 = vmatpush1.msra.mxu0 0.0
        %585 = vmatprep.subr.mxu0 0.0
        %586 = vmatpush1.msra.mxu0 0.0
        %587 = vmatprep.subr.mxu0 0.0
        %588 = vmatpush1.msra.mxu0 0.0
        %589 = vmatprep.subr.mxu0 0.0
        %590 = vmatpush1.msra.mxu0 0.0
        %591 = vmatprep.subr.mxu0 0.0
        %592 = vmatpush1.msra.mxu0 0.0
        %593 = vmatprep.subr.mxu0 0.0
        %594 = vmatpush1.msra.mxu0 0.0
        %595 = vmatprep.subr.mxu0 0.0
        %596 = vmatpush1.msra.mxu0 0.0
        %597 = vmatprep.subr.mxu0 0.0
        %598 = vmatpush1.msra.mxu0 0.0
        %599 = vmatprep.mubr.f32.mxu0 0.0
        %600 = vmatmul.mubr.f32.gmra.mrb[0].mxu0 %v533
        %v601 = vpop.f32.mrb[0].mxu0
        %v602 = vadd.f32 0.0, %v601
        %v603 = vpop.f32.mrb[0].mxu0
        %v604 = vadd.f32 0.0, %v603
        %605 = vdwg.mxu0
        %vm606 = vcmp.ge.f32.partialorder %v602, 0.0
        %vm607 = vcmp.ge.f32.partialorder %v604, 0.0
        %v608 = vmul.f32 %v602, 0.01
        %v609 = vmul.f32 %v604, 0.01
        %v610 = vsel %vm606, %v602, %v608
        %v611 = vsel %vm607, %v604, %v609
        %612 = vrot.lane.b32.xlu0 %v610, 17
        %v613 = vpop.permute.xlu0 %612
        %614 = vrot.lane.b32.xlu0 %v611, 17
        %v615 = vpop.permute.xlu0 %614
        %v616 = vsel %vm185, %v613, %v615
        %v617 = vsel %vm185, %v615, %v613
        %v618 = vmul.f32 %v617, %v191
        %v619 = vmul.f32 %v616, %v195
        %620 = vst [vmem:[#allocation2] sm:$0xff] %v618
        %621 = vst [vmem:[#allocation2 + $0x8] sm:$0xff] %v619
        %622 = vrot.lane.b32.xlu0 %v610, 16
        %v623 = vpop.permute.xlu0 %622
        %624 = vrot.lane.b32.xlu0 %v611, 16
        %v625 = vpop.permute.xlu0 %624
        %v626 = vsel %vm204, %v623, %v625
        %v627 = vsel %vm204, %v625, %v623
        %v628 = vmul.f32 %v627, %v210
        %v629 = vmul.f32 %v626, %v214
        %630 = vst [vmem:[#allocation2 + $0x10] sm:$0xff] %v628
        %631 = vst [vmem:[#allocation2 + $0x18] sm:$0xff] %v629
        %632 = vrot.lane.b32.xlu0 %v610, 15
        %v633 = vpop.permute.xlu0 %632
        %634 = vrot.lane.b32.xlu0 %v611, 15
        %v635 = vpop.permute.xlu0 %634
        %v636 = vsel %vm223, %v633, %v635
        %v637 = vsel %vm223, %v635, %v633
        %v638 = vmul.f32 %v637, %v229
        %v639 = vmul.f32 %v636, %v233
        %640 = vst [vmem:[#allocation2 + $0x20] sm:$0xff] %v638
        %641 = vst [vmem:[#allocation2 + $0x28] sm:$0xff] %v639
        %642 = vrot.lane.b32.xlu0 %v610, 1
        %v643 = vpop.permute.xlu0 %642
        %644 = vrot.lane.b32.xlu0 %v611, 1
        %v645 = vpop.permute.xlu0 %644
        %v646 = vsel %vm242, %v643, %v645
        %v647 = vsel %vm242, %v645, %v643
        %v648 = vmul.f32 %v647, %v248
        %v649 = vmul.f32 %v646, %v252
        %650 = vst [vmem:[#allocation2 + $0x30] sm:$0xff] %v648
        %651 = vst [vmem:[#allocation2 + $0x38] sm:$0xff] %v649
        %652 = vst [vmem:[#allocation2 + $0x40] sm:$0xff] %v610
        %653 = vst [vmem:[#allocation2 + $0x48] sm:$0xff] %v611
        %654 = vrot.lane.b32.xlu0 %v610, 127
        %v655 = vpop.permute.xlu0 %654
        %656 = vrot.lane.b32.xlu0 %v611, 127
        %v657 = vpop.permute.xlu0 %656
        %v658 = vsel %vm263, %v655, %v657
        %v659 = vsel %vm263, %v657, %v655
        %v660 = vmul.f32 %v658, %v269
        %v661 = vmul.f32 %v659, %v273
        %662 = vst [vmem:[#allocation2 + $0x50] sm:$0xff] %v660
        %663 = vst [vmem:[#allocation2 + $0x58] sm:$0xff] %v661
        %664 = vrot.lane.b32.xlu0 %v610, 113
        %v665 = vpop.permute.xlu0 %664
        %666 = vrot.lane.b32.xlu0 %v611, 113
        %v667 = vpop.permute.xlu0 %666
        %v668 = vsel %vm282, %v665, %v667
        %v669 = vsel %vm282, %v667, %v665
        %v670 = vmul.f32 %v668, %v288
        %v671 = vmul.f32 %v669, %v292
        %672 = vst [vmem:[#allocation2 + $0x60] sm:$0xff] %v670
        %673 = vst [vmem:[#allocation2 + $0x68] sm:$0xff] %v671
        %674 = vrot.lane.b32.xlu0 %v610, 112
        %v675 = vpop.permute.xlu0 %674
        %676 = vrot.lane.b32.xlu0 %v611, 112
        %v677 = vpop.permute.xlu0 %676
        %v678 = vsel %vm301, %v675, %v677
        %v679 = vsel %vm301, %v677, %v675
        %v680 = vmul.f32 %v678, %v307
        %v681 = vmul.f32 %v679, %v311
        %682 = vst [vmem:[#allocation2 + $0x70] sm:$0xff] %v680
        %683 = vst [vmem:[#allocation2 + $0x78] sm:$0xff] %v681
        %684 = vrot.lane.b32.xlu0 %v610, 111
        %v685 = vpop.permute.xlu0 %684
        %686 = vrot.lane.b32.xlu0 %v611, 111
        %v687 = vpop.permute.xlu0 %686
        %v688 = vsel %vm320, %v685, %v687
        %v689 = vsel %vm320, %v687, %v685
        %v690 = vmul.f32 %v688, %v326
        %v691 = vmul.f32 %v689, %v330
        %692 = vst [vmem:[#allocation2 + $0x80] sm:$0xff] %v690
        %693 = vst [vmem:[#allocation2 + $0x88] sm:$0xff] %v691
        %v694 = vld [vmem:[#allocation2] sm:$0xff]
        %v695 = vld [vmem:[#allocation2 + $0x8] sm:$0xff]
        %v696 = vld [vmem:[#allocation2 + $0x10] sm:$0xff]
        %v697 = vld [vmem:[#allocation2 + $0x18] sm:$0xff]
        %v698 = vld [vmem:[#allocation2 + $0x20] sm:$0xff]
        %v699 = vld [vmem:[#allocation2 + $0x28] sm:$0xff]
        %v700 = vld [vmem:[#allocation2 + $0x30] sm:$0xff]
        %v701 = vld [vmem:[#allocation2 + $0x38] sm:$0xff]
        %v702 = vld [vmem:[#allocation2 + $0x40] sm:$0xff]
        %v703 = vld [vmem:[#allocation2 + $0x48] sm:$0xff]
        %v704 = vld [vmem:[#allocation2 + $0x50] sm:$0xff]
        %v705 = vld [vmem:[#allocation2 + $0x58] sm:$0xff]
        %v706 = vld [vmem:[#allocation2 + $0x60] sm:$0xff]
        %v707 = vld [vmem:[#allocation2 + $0x68] sm:$0xff]
        %v708 = vld [vmem:[#allocation2 + $0x70] sm:$0xff]
        %v709 = vld [vmem:[#allocation2 + $0x78] sm:$0xff]
        %v710 = vld [vmem:[#allocation2 + $0x80] sm:$0xff]
        %v711 = vld [vmem:[#allocation2 + $0x88] sm:$0xff]
        %v712 = vld [vmem:[#allocation2 + $0x90] sm:$0xff]
        %v713 = vld [vmem:[#allocation2 + $0x98] sm:$0xff]
        %v715 = vsel %vm355, %v172, 0
        %717 = vmatprep.subr.mxu0 %v695
        %718 = vmatpush1.msra.mxu0 %v694
        %719 = vmatprep.subr.mxu0 %v697
        %720 = vmatpush1.msra.mxu0 %v696
        %721 = vmatprep.subr.mxu0 %v699
        %722 = vmatpush1.msra.mxu0 %v698
        %723 = vmatprep.subr.mxu0 %v701
        %724 = vmatpush1.msra.mxu0 %v700
        %725 = vmatprep.subr.mxu0 %v703
        %726 = vmatpush1.msra.mxu0 %v702
        %727 = vmatprep.subr.mxu0 %v705
        %728 = vmatpush1.msra.mxu0 %v704
        %729 = vmatprep.subr.mxu0 %v707
        %730 = vmatpush1.msra.mxu0 %v706
        %731 = vmatprep.subr.mxu0 %v709
        %732 = vmatpush1.msra.mxu0 %v708
        %733 = vmatprep.subr.mxu0 %v711
        %734 = vmatpush1.msra.mxu0 %v710
        %735 = vmatprep.subr.mxu0 %v713
        %736 = vmatpush1.msra.mxu0 %v712
        %737 = vmatprep.subr.mxu0 0.0
        %738 = vmatpush1.msra.mxu0 0.0
        %739 = vmatprep.subr.mxu0 0.0
        %740 = vmatpush1.msra.mxu0 0.0
        %741 = vmatprep.subr.mxu0 0.0
        %742 = vmatpush1.msra.mxu0 0.0
        %743 = vmatprep.subr.mxu0 0.0
        %744 = vmatpush1.msra.mxu0 0.0
        %745 = vmatprep.subr.mxu0 0.0
        %746 = vmatpush1.msra.mxu0 0.0
        %747 = vmatprep.subr.mxu0 0.0
        %748 = vmatpush1.msra.mxu0 0.0
        %749 = vmatprep.subr.mxu0 0.0
        %750 = vmatpush1.msra.mxu0 0.0
        %751 = vmatprep.subr.mxu0 0.0
        %752 = vmatpush1.msra.mxu0 0.0
        %753 = vmatprep.subr.mxu0 0.0
        %754 = vmatpush1.msra.mxu0 0.0
        %755 = vmatprep.subr.mxu0 0.0
        %756 = vmatpush1.msra.mxu0 0.0
        %757 = vmatprep.subr.mxu0 0.0
        %758 = vmatpush1.msra.mxu0 0.0
        %759 = vmatprep.subr.mxu0 0.0
        %760 = vmatpush1.msra.mxu0 0.0
        %761 = vmatprep.subr.mxu0 0.0
        %762 = vmatpush1.msra.mxu0 0.0
        %763 = vmatprep.subr.mxu0 0.0
        %764 = vmatpush1.msra.mxu0 0.0
        %765 = vmatprep.subr.mxu0 0.0
        %766 = vmatpush1.msra.mxu0 0.0
        %767 = vmatprep.subr.mxu0 0.0
        %768 = vmatpush1.msra.mxu0 0.0
        %769 = vmatprep.subr.mxu0 0.0
        %770 = vmatpush1.msra.mxu0 0.0
        %771 = vmatprep.subr.mxu0 0.0
        %772 = vmatpush1.msra.mxu0 0.0
        %773 = vmatprep.subr.mxu0 0.0
        %774 = vmatpush1.msra.mxu0 0.0
        %775 = vmatprep.subr.mxu0 0.0
        %776 = vmatpush1.msra.mxu0 0.0
        %777 = vmatprep.subr.mxu0 0.0
        %778 = vmatpush1.msra.mxu0 0.0
        %779 = vmatprep.subr.mxu0 0.0
        %780 = vmatpush1.msra.mxu0 0.0
        %781 = vmatprep.mubr.f32.mxu0 0.0
        %782 = vmatmul.mubr.f32.gmra.mrb[0].mxu0 %v715
        %v783 = vpop.f32.mrb[0].mxu0
        %v784 = vadd.f32 0.0, %v783
        %v785 = vpop.f32.mrb[0].mxu0
        %v786 = vadd.f32 0.0, %v785
        %787 = vdwg.mxu0
        %v788 = vadd.f32 %v426, %v784
        %v789 = vadd.f32 %v428, %v786
        %v790 = vmax.f32 %v788, 0.0
        %v791 = vmax.f32 %v789, 0.0
        %792 = vrot.lane.b32.xlu0 %v790, 17
        %v793 = vpop.permute.xlu0 %792
        %794 = vrot.lane.b32.xlu0 %v791, 17
        %v795 = vpop.permute.xlu0 %794
        %v796 = vsel %vm185, %v793, %v795
        %v797 = vsel %vm185, %v795, %v793
        %v798 = vmul.f32 %v797, %v191
        %v799 = vmul.f32 %v796, %v195
        %800 = vst [vmem:[#allocation2] sm:$0xff] %v798
        %801 = vst [vmem:[#allocation2 + $0x8] sm:$0xff] %v799
        %802 = vrot.lane.b32.xlu0 %v790, 16
        %v803 = vpop.permute.xlu0 %802
        %804 = vrot.lane.b32.xlu0 %v791, 16
        %v805 = vpop.permute.xlu0 %804
        %v806 = vsel %vm204, %v803, %v805
        %v807 = vsel %vm204, %v805, %v803
        %v808 = vmul.f32 %v807, %v210
        %v809 = vmul.f32 %v806, %v214
        %810 = vst [vmem:[#allocation2 + $0x10] sm:$0xff] %v808
        %811 = vst [vmem:[#allocation2 + $0x18] sm:$0xff] %v809
        %812 = vrot.lane.b32.xlu0 %v790, 15
        %v813 = vpop.permute.xlu0 %812
        %814 = vrot.lane.b32.xlu0 %v791, 15
        %v815 = vpop.permute.xlu0 %814
        %v816 = vsel %vm223, %v813, %v815
        %v817 = vsel %vm223, %v815, %v813
        %v818 = vmul.f32 %v817, %v229
        %v819 = vmul.f32 %v816, %v233
        %820 = vst [vmem:[#allocation2 + $0x20] sm:$0xff] %v818
        %821 = vst [vmem:[#allocation2 + $0x28] sm:$0xff] %v819
        %822 = vrot.lane.b32.xlu0 %v790, 1
        %v823 = vpop.permute.xlu0 %822
        %824 = vrot.lane.b32.xlu0 %v791, 1
        %v825 = vpop.permute.xlu0 %824
        %v826 = vsel %vm242, %v823, %v825
        %v827 = vsel %vm242, %v825, %v823
        %v828 = vmul.f32 %v827, %v248
        %v829 = vmul.f32 %v826, %v252
        %830 = vst [vmem:[#allocation2 + $0x30] sm:$0xff] %v828
        %831 = vst [vmem:[#allocation2 + $0x38] sm:$0xff] %v829
        %832 = vst [vmem:[#allocation2 + $0x40] sm:$0xff] %v790
        %833 = vst [vmem:[#allocation2 + $0x48] sm:$0xff] %v791
        %834 = vrot.lane.b32.xlu0 %v790, 127
        %v835 = vpop.permute.xlu0 %834
        %836 = vrot.lane.b32.xlu0 %v791, 127
        %v837 = vpop.permute.xlu0 %836
        %v838 = vsel %vm263, %v835, %v837
        %v839 = vsel %vm263, %v837, %v835
        %v840 = vmul.f32 %v838, %v269
        %v841 = vmul.f32 %v839, %v273
        %842 = vst [vmem:[#allocation2 + $0x50] sm:$0xff] %v840
        %843 = vst [vmem:[#allocation2 + $0x58] sm:$0xff] %v841
        %844 = vrot.lane.b32.xlu0 %v790, 113
        %v845 = vpop.permute.xlu0 %844
        %846 = vrot.lane.b32.xlu0 %v791, 113
        %v847 = vpop.permute.xlu0 %846
        %v848 = vsel %vm282, %v845, %v847
        %v849 = vsel %vm282, %v847, %v845
        %v850 = vmul.f32 %v848, %v288
        %v851 = vmul.f32 %v849, %v292
        %852 = vst [vmem:[#allocation2 + $0x60] sm:$0xff] %v850
        %853 = vst [vmem:[#allocation2 + $0x68] sm:$0xff] %v851
        %854 = vrot.lane.b32.xlu0 %v790, 112
        %v855 = vpop.permute.xlu0 %854
        %856 = vrot.lane.b32.xlu0 %v791, 112
        %v857 = vpop.permute.xlu0 %856
        %v858 = vsel %vm301, %v855, %v857
        %v859 = vsel %vm301, %v857, %v855
        %v860 = vmul.f32 %v858, %v307
        %v861 = vmul.f32 %v859, %v311
        %862 = vst [vmem:[#allocation2 + $0x70] sm:$0xff] %v860
        %863 = vst [vmem:[#allocation2 + $0x78] sm:$0xff] %v861
        %864 = vrot.lane.b32.xlu0 %v790, 111
        %v865 = vpop.permute.xlu0 %864
        %866 = vrot.lane.b32.xlu0 %v791, 111
        %v867 = vpop.permute.xlu0 %866
        %v868 = vsel %vm320, %v865, %v867
        %v869 = vsel %vm320, %v867, %v865
        %v870 = vmul.f32 %v868, %v326
        %v871 = vmul.f32 %v869, %v330
        %872 = vst [vmem:[#allocation2 + $0x80] sm:$0xff] %v870
        %873 = vst [vmem:[#allocation2 + $0x88] sm:$0xff] %v871
        %v874 = vld [vmem:[#allocation2] sm:$0xff]
        %v875 = vld [vmem:[#allocation2 + $0x8] sm:$0xff]
        %v876 = vld [vmem:[#allocation2 + $0x10] sm:$0xff]
        %v877 = vld [vmem:[#allocation2 + $0x18] sm:$0xff]
        %v878 = vld [vmem:[#allocation2 + $0x20] sm:$0xff]
        %v879 = vld [vmem:[#allocation2 + $0x28] sm:$0xff]
        %v880 = vld [vmem:[#allocation2 + $0x30] sm:$0xff]
        %v881 = vld [vmem:[#allocation2 + $0x38] sm:$0xff]
        %v882 = vld [vmem:[#allocation2 + $0x40] sm:$0xff]
        %v883 = vld [vmem:[#allocation2 + $0x48] sm:$0xff]
        %v884 = vld [vmem:[#allocation2 + $0x50] sm:$0xff]
        %v885 = vld [vmem:[#allocation2 + $0x58] sm:$0xff]
        %v886 = vld [vmem:[#allocation2 + $0x60] sm:$0xff]
        %v887 = vld [vmem:[#allocation2 + $0x68] sm:$0xff]
        %v888 = vld [vmem:[#allocation2 + $0x70] sm:$0xff]
        %v889 = vld [vmem:[#allocation2 + $0x78] sm:$0xff]
        %v890 = vld [vmem:[#allocation2 + $0x80] sm:$0xff]
        %v891 = vld [vmem:[#allocation2 + $0x88] sm:$0xff]
        %v892 = vld [vmem:[#allocation2 + $0x90] sm:$0xff]
        %v893 = vld [vmem:[#allocation2 + $0x98] sm:$0xff]
        %v895 = vsel %vm355, %v173, 0
        %v898 = vsel %vm355, %v174, 0
        %900 = vmatprep.subr.mxu0 %v875
        %901 = vmatpush1.msra.mxu0 %v874
        %902 = vmatprep.subr.mxu0 %v877
        %903 = vmatpush1.msra.mxu0 %v876
        %904 = vmatprep.subr.mxu0 %v879
        %905 = vmatpush1.msra.mxu0 %v878
        %906 = vmatprep.subr.mxu0 %v881
        %907 = vmatpush1.msra.mxu0 %v880
        %908 = vmatprep.subr.mxu0 %v883
        %909 = vmatpush1.msra.mxu0 %v882
        %910 = vmatprep.subr.mxu0 %v885
        %911 = vmatpush1.msra.mxu0 %v884
        %912 = vmatprep.subr.mxu0 %v887
        %913 = vmatpush1.msra.mxu0 %v886
        %914 = vmatprep.subr.mxu0 %v889
        %915 = vmatpush1.msra.mxu0 %v888
        %916 = vmatprep.subr.mxu0 %v891
        %917 = vmatpush1.msra.mxu0 %v890
        %918 = vmatprep.subr.mxu0 %v893
        %919 = vmatpush1.msra.mxu0 %v892
        %920 = vmatprep.subr.mxu0 0.0
        %921 = vmatpush1.msra.mxu0 0.0
        %922 = vmatprep.subr.mxu0 0.0
        %923 = vmatpush1.msra.mxu0 0.0
        %924 = vmatprep.subr.mxu0 0.0
        %925 = vmatpush1.msra.mxu0 0.0
        %926 = vmatprep.subr.mxu0 0.0
        %927 = vmatpush1.msra.mxu0 0.0
        %928 = vmatprep.subr.mxu0 0.0
        %929 = vmatpush1.msra.mxu0 0.0
        %930 = vmatprep.subr.mxu0 0.0
        %931 = vmatpush1.msra.mxu0 0.0
        %932 = vmatprep.subr.mxu0 0.0
        %933 = vmatpush1.msra.mxu0 0.0
        %934 = vmatprep.subr.mxu0 0.0
        %935 = vmatpush1.msra.mxu0 0.0
        %936 = vmatprep.subr.mxu0 0.0
        %937 = vmatpush1.msra.mxu0 0.0
        %938 = vmatprep.subr.mxu0 0.0
        %939 = vmatpush1.msra.mxu0 0.0
        %940 = vmatprep.subr.mxu0 0.0
        %941 = vmatpush1.msra.mxu0 0.0
        %942 = vmatprep.subr.mxu0 0.0
        %943 = vmatpush1.msra.mxu0 0.0
        %944 = vmatprep.subr.mxu0 0.0
        %945 = vmatpush1.msra.mxu0 0.0
        %946 = vmatprep.subr.mxu0 0.0
        %947 = vmatpush1.msra.mxu0 0.0
        %948 = vmatprep.subr.mxu0 0.0
        %949 = vmatpush1.msra.mxu0 0.0
        %950 = vmatprep.subr.mxu0 0.0
        %951 = vmatpush1.msra.mxu0 0.0
        %952 = vmatprep.subr.mxu0 0.0
        %953 = vmatpush1.msra.mxu0 0.0
        %954 = vmatprep.subr.mxu0 0.0
        %955 = vmatpush1.msra.mxu0 0.0
        %956 = vmatprep.subr.mxu0 0.0
        %957 = vmatpush1.msra.mxu0 0.0
        %958 = vmatprep.subr.mxu0 0.0
        %959 = vmatpush1.msra.mxu0 0.0
        %960 = vmatprep.subr.mxu0 0.0
        %961 = vmatpush1.msra.mxu0 0.0
        %962 = vmatprep.subr.mxu0 0.0
        %963 = vmatpush1.msra.mxu0 0.0
        %964 = vmatprep.mubr.f32.mxu0 0.0
        %965 = vmatmul.mubr.f32.gmra.mrb[0].mxu0 %v895
        %v966 = vpop.f32.mrb[0].mxu0
        %v967 = vadd.f32 0.0, %v966
        %v968 = vpop.f32.mrb[0].mxu0
        %v969 = vadd.f32 0.0, %v968
        %970 = vmatprep.mubr.f32.mxu0 0.0
        %971 = vmatmul.mubr.f32.gmra.mrb[0].mxu0 %v898
        %v972 = vpop.f32.mrb[0].mxu0
        %v973 = vadd.f32 0.0, %v972
        %v974 = vpop.f32.mrb[0].mxu0
        %v975 = vadd.f32 0.0, %v974
        %976 = vdwg.mxu0
        %v977 = vtanh.pop %v967
        %v978 = vtanh.pop %v969
        %v979 = vtanh.pop %v973
        %v980 = vtanh.pop %v975
        %981 = vst [vmem:[%s160] sm:$0xff] %v977
        %982 = vst [vmem:[%s160 + $0x8] sm:$0xff] %v978
        %983 = vst [vmem:[%s160 + $0x10] sm:$0xf] %v979
        %984 = vst [vmem:[%s160 + $0x18] sm:$0xf] %v980
        %s985 = sand.u32 %s90, 1
        %s986 = sand.u32 %s90, 1
        %s987 = smul.addr %s986, 32
        %s988 = scalar_lea.vmem [#allocation3], %s987
        // Predicated region
        $region33: #{generator_forward_pallas.1} parent=31 // pred_check
          %p989 = pneg %p100
        $region34: #{generator_forward_pallas.1} parent=31 // pred_check_branch
          %991 = sbr.rel (%p989) target = $region36
        $region35: #{generator_forward_pallas.1} parent=31 // pred_region
          %s992 = smul.u32 2, %s14
          %s993 = smul.addr %s992, 8
          %s994 = scalar_lea.vmem %s3, %s993
          // Predicated region
          $region37: #{generator_forward_pallas.1} parent=35 // pred_check
            _
          $region38: #{generator_forward_pallas.1} parent=35 // pred_check_branch
            %996 = sbr.rel (0) target = $region40
          $region39: #{generator_forward_pallas.1} parent=35 // pred_region
            // Predicated region
            $region41: #{generator_forward_pallas.1} parent=39 // pred_check
              _
            $region42: #{generator_forward_pallas.1} parent=39 // pred_check_branch
              %998 = sbr.rel (0) target = $region44
            $region43: #{generator_forward_pallas.1} parent=39 // pred_region
              loop: start=0, step=1, limit=1
              $region45: #{generator_forward_pallas.1} parent=43 // loop_pre_header
                _
              $region46: #{generator_forward_pallas.1} parent=43 // loop_header
                %s1000 = sphi 0, %s1004
                %p1001 = scmp.ge.s32.totalorder %s1000, 1
                %s1005 = sphi %s988, %s988
                %s1006 = sphi %s994, %s994
              $region47: #{generator_forward_pallas.1} parent=43 // loop_header_branch
                %1003 = sbr.rel (%p1001) target = $region51
              $region48: #{generator_forward_pallas.1} parent=43 // loop_body
                %v1007 = vld [vmem:[%s1005] sm:$0xff]
                %1008 = vst [vmem:[%s1006] sm:$0xff] %v1007
                %v1009 = vld [vmem:[%s1005 + $0x8] sm:$0xff]
                %1010 = vst [vmem:[%s1006 + $0x8] sm:$0xff] %v1009
                %v1011 = vld [vmem:[%s1005 + $0x10] sm:$0xff]
                %1012 = vst [vmem:[%s1006 + $0x20] sm:$0xff] %v1011
                %v1013 = vld [vmem:[%s1005 + $0x18] sm:$0xff]
                %1014 = vst [vmem:[%s1006 + $0x28] sm:$0xff] %v1013
              $region49: #{generator_forward_pallas.1} parent=43 // loop_footer
                %s1004 = sadd.s32 1, %s1000
              $region50: #{generator_forward_pallas.1} parent=43 // loop_footer_branch
                %999 = sbr.rel target = $region46
              $region51: #{generator_forward_pallas.1} parent=43 // loop_exit
                _
            $region44: #{generator_forward_pallas.1} parent=39 // pred_fallthru
              _
            // Predicated region
            $region52: #{generator_forward_pallas.1} parent=39 // pred_check
              _
            $region53: #{generator_forward_pallas.1} parent=39 // pred_check_branch
              %1016 = sbr.rel target = $region55
            $region54: #{generator_forward_pallas.1} parent=39 // pred_region
              _
            $region55: #{generator_forward_pallas.1} parent=39 // pred_fallthru
              _
          $region40: #{generator_forward_pallas.1} parent=35 // pred_fallthru
            _
          %1017 = vnop
        $region36: #{generator_forward_pallas.1} parent=31 // pred_fallthru
          _
      $region32: #{generator_forward_pallas.1} parent=5 // pred_fallthru
        _
      %p1018 = scmp.le.s32.totalorder 2, %s9
      // Predicated region
      $region56: #{generator_forward_pallas.1} parent=5 // pred_check
        %p1019 = pneg %p1018
      $region57: #{generator_forward_pallas.1} parent=5 // pred_check_branch
        %1021 = sbr.rel (%p1019) target = $region59
      $region58: #{generator_forward_pallas.1} parent=5 // pred_region
        %s1022 = ssub.s32 %s9, 2
        // Predicated region
        $region60: #{generator_forward_pallas.1} parent=58 // pred_check
          %p1023 = pneg %p106
        $region61: #{generator_forward_pallas.1} parent=58 // pred_check_branch
          %1025 = sbr.rel (%p1023) target = $region63
        $region62: #{generator_forward_pallas.1} parent=58 // pred_region
          %s1026 = sand.u32 %s91, 1
          %s1027 = sand.u32 %s91, 1
          %s1028 = smul.addr %s1027, 32
          %s1029 = scalar_lea.vmem [#allocation3], %s1028
        $region63: #{generator_forward_pallas.1} parent=58 // pred_fallthru
          _
      $region59: #{generator_forward_pallas.1} parent=5 // pred_fallthru
        _
    $region6: #{generator_forward_pallas.1} parent=1 // loop_footer
      %s13 = sadd.s32 1, %s9
    $region7: #{generator_forward_pallas.1} parent=1 // loop_footer_branch
      %8 = sbr.rel target = $region3
    $region8: #{generator_forward_pallas.1} parent=1 // loop_exit
      _

</llo_original>
